<compile_context>
chip_gen: v7x
topology: tpu7x:2x2x1
jax: 0.10.0
libtpu: 0.0.40
codegen_flags: <defaults>
</compile_context>

<pallas_src>
import functools

import jax
import jax.numpy as jnp
from jax.experimental import pallas as pl
from jax.experimental.pallas import tpu as pltpu

_VMEM_LIMIT = 48 * 1024 * 1024        # scoped-VMEM request: safe on v7x (64 MiB phys)
_PLAN_BUDGET = 40 * 1024 * 1024       # target for the explicit tile plan
_W_RESIDENT_BYTES = 24 * 1024 * 1024  # max double-buffered weight stripe


def _choose_tiles(M, K, N, *, has_residual, has_ln):
    """Pick (tm, tn) for a full-K (tk == K) matmul under a VMEM plan budget.

    tn = N whenever the double-buffered (K, N) weight fits, making the weight
    fully VMEM-resident (read from HBM once).  tm is a multiple of 128
    (or the full M when M is small) so tiles stay MXU-friendly on v5e.
    """
    if 2 * (K * N * 2) <= _W_RESIDENT_BYTES or N <= 128:
        tn = N
    else:
        tn = min(2048, (N // 128) * 128)
        if tn >= N:
            tn = N

    def plan_bytes(tm):
        b = 2 * (K * tn * 2)            # weight stripe (double-buffered)
        b += 2 * (tm * K * 2)           # x tile
        b += 2 * (tm * tn * 2)          # out tile
        if has_residual:
            b += 2 * (tm * tn * 2)      # residual tile
        b += tm * tn * 4                # f32 epilogue temporaries
        if has_ln:
            b += tm * K * 4             # f32 LayerNorm temporaries
        return b

    if M <= 512:
        tm = M
    else:
        tm = 512
        while tm > 128 and plan_bytes(tm) > _PLAN_BUDGET:
            tm -= 128
    return tm, tn


# --------------------------------------------------------------------------
# Pallas kernels
# --------------------------------------------------------------------------
def _matmul_kernel(*refs, activation, has_residual, has_ln, eps):
    """y = [LN(x)] @ w + b [+ gelu_tanh] [+ residual], f32 accumulation."""
    x_ref, w_ref, b_ref = refs[0], refs[1], refs[2]
    i = 3
    if has_ln:
        g_ref, bt_ref = refs[i], refs[i + 1]
        i += 2
    if has_residual:
        r_ref = refs[i]
        i += 1
    o_ref = refs[i]

    x = x_ref[...]
    if has_ln:
        xf = x.astype(jnp.float32)
        mean = jnp.mean(xf, axis=-1, keepdims=True)
        var = jnp.mean(jnp.square(xf - mean), axis=-1, keepdims=True)
        xf = (xf - mean) * jax.lax.rsqrt(var + jnp.float32(eps))
        xf = xf * g_ref[...].astype(jnp.float32) + bt_ref[...].astype(jnp.float32)
        x = xf.astype(x_ref.dtype)

    acc = jnp.dot(x, w_ref[...], preferred_element_type=jnp.float32)
    acc = acc + b_ref[...].astype(jnp.float32)
    if activation == "gelu_tanh":
        # gelu_pytorch_tanh: 0.5*x*(1 + tanh(sqrt(2/pi)*(x + 0.044715*x^3)))
        c = jnp.float32(0.7978845608028654)  # sqrt(2/pi)
        acc = 0.5 * acc * (1.0 + jnp.tanh(c * (acc + 0.044715 * acc * acc * acc)))
    if has_residual:
        acc = acc + r_ref[...].astype(jnp.float32)
    o_ref[...] = acc.astype(o_ref.dtype)


def matmul_bias(x, w, b, *, activation=None, residual=None, ln=None, out_dtype=None):
    """y = [LN(x)] @ w + b, optional fused GELU-tanh and fused residual add.

    x:(M,K)  w:(K,N)  b:(N,)  residual:(M,N)|None  ln:(gamma, beta, eps)|None.
    The grid is (N-blocks, M-blocks) with tk == K, so the weight column
    stripe is VMEM-resident across the inner M sweep (read from HBM once).
    """
    M, K = x.shape
    K2, N = w.shape
    assert K == K2
    out_dtype = out_dtype or x.dtype
    has_ln = ln is not None
    has_res = residual is not None
    tm, tn = _choose_tiles(M, K, N, has_residual=has_res, has_ln=has_ln)
    grid = (pl.cdiv(N, tn), pl.cdiv(M, tm))   # N outer -> weight reuse across M

    in_specs = [
        pl.BlockSpec((tm, K), lambda j, i: (i, 0)),
        pl.BlockSpec((K, tn), lambda j, i: (0, j)),
        pl.BlockSpec((1, tn), lambda j, i: (0, j)),
    ]
    inputs = [x, w, b.reshape(1, N)]
    eps = 0.0
    if has_ln:
        gamma, beta, eps = ln
        in_specs += [pl.BlockSpec((1, K), lambda j, i: (0, 0)),
                     pl.BlockSpec((1, K), lambda j, i: (0, 0))]
        inputs += [gamma.reshape(1, K), beta.reshape(1, K)]
    if has_res:
        in_specs.append(pl.BlockSpec((tm, tn), lambda j, i: (i, j)))
        inputs.append(residual)

    kernel = functools.partial(_matmul_kernel, activation=activation,
                               has_residual=has_res, has_ln=has_ln, eps=float(eps))
    return pl.pallas_call(
        kernel,
        out_shape=jax.ShapeDtypeStruct((M, N), out_dtype),
        grid=grid,
        in_specs=in_specs,
        out_specs=pl.BlockSpec((tm, tn), lambda j, i: (i, j)),
        compiler_params=pltpu.CompilerParams(
            dimension_semantics=("parallel", "parallel"),
            vmem_limit_bytes=_VMEM_LIMIT,
        ),
    )(*inputs)


def _patch_embed_kernel(x_ref, w_ref, b_ref, pos_ref, o_ref):
    acc = jnp.dot(x_ref[...], w_ref[...], preferred_element_type=jnp.float32)
    acc = acc + b_ref[...].astype(jnp.float32) + pos_ref[...].astype(jnp.float32)
    o_ref[...] = acc.astype(o_ref.dtype)


def patch_embed(patches, w, b, pos):
    """Conv(stride=P) as matmul + bias + position embedding.

    patches:(B,N,CPP)  w:(CPP,D)  b:(D,)  pos:(N,D)  ->  (B,N,D)
    The pos table is indexed per row-block (broadcast over batch by the
    index_map) so no (B,N,D) broadcast tensor is materialized in HBM.
    """
    B, N, K = patches.shape
    D = w.shape[1]
    return pl.pallas_call(
        _patch_embed_kernel,
        out_shape=jax.ShapeDtypeStruct((B, N, D), w.dtype),
        grid=(B,),
        in_specs=[
            pl.BlockSpec((None, N, K), lambda bi: (bi, 0, 0)),
            pl.BlockSpec((K, D), lambda bi: (0, 0)),
            pl.BlockSpec((1, D), lambda bi: (0, 0)),
            pl.BlockSpec((N, D), lambda bi: (0, 0)),
        ],
        out_specs=pl.BlockSpec((None, N, D), lambda bi: (bi, 0, 0)),
        compiler_params=pltpu.CompilerParams(
            dimension_semantics=("parallel",),
            vmem_limit_bytes=_VMEM_LIMIT,
        ),
    )(patches, w, b.reshape(1, D), pos)


def _attention_kernel(qkv_ref, o_ref, *, num_heads, d_model, scale):
    """Full (non-causal) attention for one batch element from fused qkv.

    qkv_ref: (S, 3D) with column layout [Q heads | K heads | V heads],
    each head occupying hd contiguous columns.  Output written head-by-head
    into the (S, D) block, i.e. already in the merged (B, S, D) layout.
    """
    hd = d_model // num_heads
    for h in range(num_heads):
        q = qkv_ref[:, pl.ds(h * hd, hd)]
        k = qkv_ref[:, pl.ds(d_model + h * hd, hd)]
        v = qkv_ref[:, pl.ds(2 * d_model + h * hd, hd)]
        # Scores in f32; scale applied to the f32 scores (not to bf16 Q).
        s = jax.lax.dot_general(q, k, (((1,), (1,)), ((), ())),
                                preferred_element_type=jnp.float32)
        s = s * jnp.float32(scale)
        m = jnp.max(s, axis=-1, keepdims=True)
        p = jnp.exp(s - m)
        denom = jnp.sum(p, axis=-1, keepdims=True)
        o = jnp.dot(p.astype(v.dtype), v, preferred_element_type=jnp.float32)
        o = o / denom   # exact divide on (S, hd); negligible cost, exact softmax
        o_ref[:, pl.ds(h * hd, hd)] = o.astype(o_ref.dtype)


def attention_fused(qkv, *, num_heads, scale):
    """qkv:(B,S,3D) -> (B,S,D).  No head split/merge transposes in HBM."""
    B, S, threeD = qkv.shape
    D = threeD // 3
    kernel = functools.partial(_attention_kernel, num_heads=num_heads,
                               d_model=D, scale=scale)
    return pl.pallas_call(
        kernel,
        out_shape=jax.ShapeDtypeStruct((B, S, D), qkv.dtype),
        grid=(B,),
        in_specs=[pl.BlockSpec((None, S, threeD), lambda bi: (bi, 0, 0))],
        out_specs=pl.BlockSpec((None, S, D), lambda bi: (bi, 0, 0)),
        compiler_params=pltpu.CompilerParams(
            dimension_semantics=("parallel",),
            vmem_limit_bytes=_VMEM_LIMIT,
        ),
    )(qkv)


# --------------------------------------------------------------------------
# SigLIP vision model (glue around the Pallas kernels)
# --------------------------------------------------------------------------
def encoder_layer(x2, p, *, B, S, num_heads, eps):
    D = x2.shape[-1]
    hd = D // num_heads

    # --- self-attention block (pre-LN fused into the qkv matmul) ---
    qkv = matmul_bias(x2, p["qkv_w"], p["qkv_b"],
                      ln=(p["ln1_g"], p["ln1_b"], eps))          # (B*S, 3D)
    attn = attention_fused(qkv.reshape(B, S, 3 * D),
                           num_heads=num_heads, scale=hd ** -0.5)  # (B, S, D)
    # Output projection with the residual add fused into the epilogue.
    x2 = matmul_bias(attn.reshape(B * S, D), p["o_w"], p["o_b"], residual=x2)

    # --- MLP block (pre-LN fused into fc1, gelu_pytorch_tanh, residual in fc2) ---
    h = matmul_bias(x2, p["fc1_w"], p["fc1_b"],
                    ln=(p["ln2_g"], p["ln2_b"], eps), activation="gelu_tanh")
    x2 = matmul_bias(h, p["fc2_w"], p["fc2_b"], residual=x2)
    return x2


def siglip_vision_tower_forward(
    images, params, *, patch_size, num_heads, select_layer, select_feature, eps=1e-6
):
    B, C, H, W = images.shape
    P = patch_size
    Hn, Wn = H // P, W // P
    N = Hn * Wn
    D = params["patch_w"].shape[1]
    cdt = params["patch_w"].dtype          # compute dtype (bf16)

    # Patch embedding: conv(stride=P, valid) == matmul over flattened patches.
    patches = (
        images.astype(cdt)
        .reshape(B, C, Hn, P, Wn, P)
        .transpose(0, 2, 4, 1, 3, 5)       # (B, Hn, Wn, C, P, P) row-major patches
        .reshape(B, N, C * P * P)
    )
    # Learned position embedding added in the patch-embed epilogue (no CLS in SigLIP).
    x = patch_embed(patches, params["patch_w"], params["patch_b"], params["pos_emb"])
    x2 = x.reshape(B * N, D)

    hidden_states = [x2]
    for lp in params["layers"]:
        x2 = encoder_layer(x2, lp, B=B, S=N, num_heads=num_heads, eps=eps)
        hidden_states.append(x2)

    feats = hidden_states[select_layer].reshape(B, N, D)
    if select_feature == "patch":
        feats = feats[:, 1:]   # matches image_features[:, 1:] in the PyTorch module
    elif select_feature != "cls_patch":
        raise ValueError(f"Unexpected select feature: {select_feature}")

    # Affine permutation: y = x.reshape(-1, D) @ A + b, cast back to images.dtype.
    Bq, S, _ = feats.shape
    y = matmul_bias(feats.reshape(Bq * S, D), params["affine_A"], params["affine_b"],
                    out_dtype=images.dtype)
    return y.reshape(Bq, S, D)


# --------------------------------------------------------------------------
# Deterministic parameter initialization (synthetic weights)
# --------------------------------------------------------------------------
def init_params(key, *, C, P, D, inter, num_layers, num_patches,
                dtype=jnp.bfloat16):
    def nrm(k, shape, scale=0.02):
        return (scale * jax.random.normal(k, shape, jnp.float32)).astype(dtype)

    keys = iter(jax.random.split(key, 8 + 14 * num_layers))
    params = {
        "patch_w": nrm(next(keys), (C * P * P, D)),
        "patch_b": nrm(next(keys), (D,)),
        "pos_emb": nrm(next(keys), (num_patches, D)),
        "affine_A": nrm(next(keys), (D, D)),
        "affine_b": nrm(next(keys), (D,)),
        "layers": [],
    }
    for _ in range(num_layers):
        q_w, q_b = nrm(next(keys), (D, D)), nrm(next(keys), (D,))
        k_w, k_b = nrm(next(keys), (D, D)), nrm(next(keys), (D,))
        v_w, v_b = nrm(next(keys), (D, D)), nrm(next(keys), (D,))
        lp = {
            "ln1_g": jnp.ones((D,), dtype),
            "ln1_b": jnp.zeros((D,), dtype),
            # Q/K/V fused at parameter-prep time: one (D, 3D) matmul per layer.
            "qkv_w": jnp.concatenate([q_w, k_w, v_w], axis=1),
            "qkv_b": jnp.concatenate([q_b, k_b, v_b]),
            "o_w": nrm(next(keys), (D, D)),
            "o_b": nrm(next(keys), (D,)),
            "ln2_g": jnp.ones((D,), dtype),
            "ln2_b": jnp.zeros((D,), dtype),
            "fc1_w": nrm(next(keys), (D, inter)),
            "fc1_b": nrm(next(keys), (inter,)),
            "fc2_w": nrm(next(keys), (inter, D)),
            "fc2_b": nrm(next(keys), (D,)),
        }
        params["layers"].append(lp)
    return params


# --------------------------------------------------------------------------
if __name__ == "__main__":
    # Small synthetic SigLIP config.
    B, C, H, W = 2, 3, 16, 16
    P = 8                      # patch_size -> 2x2 = 4 patches
    D = 32                     # hidden_size
    HEADS = 4                  # head_dim = 8
    INTER = 64                 # intermediate_size
    LAYERS = 3                 # num_hidden_layers
    SELECT_LAYER = -2          # args.mm_vision_select_layer
    SELECT_FEATURE = "patch"   # drops the first token, as in the PyTorch code

    root = jax.random.PRNGKey(0)
    k_params, k_img = jax.random.split(root)
    params = init_params(
        k_params, C=C, P=P, D=D, inter=INTER, num_layers=LAYERS,
        num_patches=(H // P) * (W // P),
    )
    images = jax.random.normal(k_img, (B, C, H, W), jnp.float32)

    fwd = jax.jit(
        functools.partial(
            siglip_vision_tower_forward,
            patch_size=P,
            num_heads=HEADS,
            select_layer=SELECT_LAYER,
            select_feature=SELECT_FEATURE,
        )
    )
    out = fwd(images, params)
    jax.block_until_ready(out)
    assert out.shape == (B, (H // P) * (W // P) - 1, D), out.shape
    assert out.dtype == images.dtype
    print("KERNEL_OK")
</pallas_src>

<mosaic_0001>
module attributes {stable_mosaic.version = 11 : i64} {
  func.func @_matmul_kernel(%arg0: i32, %arg1: i32, %arg2: memref<8x32xbf16, #tpu.memory_space<vmem>>, %arg3: memref<32x32xbf16, #tpu.memory_space<vmem>>, %arg4: memref<1x32xbf16, #tpu.memory_space<vmem>>, %arg5: memref<8x32xbf16, #tpu.memory_space<vmem>>, %arg6: memref<8x32xbf16, #tpu.memory_space<vmem>>) attributes {dimension_semantics = [#tpu.dimension_semantics<parallel>, #tpu.dimension_semantics<parallel>], iteration_bounds = array<i64: 1, 1>, scalar_prefetch = 0 : i64, scratch_operands = 0 : i64, tpu.core_type = #tpu.core_type<tc>, window_params = [{transform_indices = @transform_0, window_bounds = array<i64: 8, 32>}, {transform_indices = @transform_1, window_bounds = array<i64: 32, 32>}, {transform_indices = @transform_2, window_bounds = array<i64: 1, 32>}, {transform_indices = @transform_3, window_bounds = array<i64: 8, 32>}, {transform_indices = @transform_4, window_bounds = array<i64: 8, 32>}]} {
    %c0 = arith.constant 0 : index
    %c0_0 = arith.constant 0 : index
    %0 = vector.load %arg2[%c0, %c0_0] : memref<8x32xbf16, #tpu.memory_space<vmem>>, vector<8x32xbf16>
    %c0_1 = arith.constant 0 : index
    %c0_2 = arith.constant 0 : index
    %1 = vector.load %arg3[%c0_1, %c0_2] : memref<32x32xbf16, #tpu.memory_space<vmem>>, vector<32x32xbf16>
    %cst = arith.constant dense<0.000000e+00> : vector<8x32xf32>
    %2 = tpu.matmul %0, %1, %cst {dimension_numbers = #tpu.dot_dimension_numbers<[1], [0], [0], [1], [0, 0, 1, 1], [], []>} : vector<8x32xbf16>, vector<32x32xbf16>, vector<8x32xf32> -> vector<8x32xf32>
    %c0_3 = arith.constant 0 : index
    %c0_4 = arith.constant 0 : index
    %3 = vector.load %arg4[%c0_3, %c0_4] : memref<1x32xbf16, #tpu.memory_space<vmem>>, vector<1x32xbf16>
    %4 = arith.extf %3 : vector<1x32xbf16> to vector<1x32xf32>
    %5 = vector.broadcast %4 : vector<1x32xf32> to vector<8x32xf32>
    %6 = arith.addf %2, %5 : vector<8x32xf32>
    %c0_5 = arith.constant 0 : index
    %c0_6 = arith.constant 0 : index
    %7 = vector.load %arg5[%c0_5, %c0_6] : memref<8x32xbf16, #tpu.memory_space<vmem>>, vector<8x32xbf16>
    %8 = arith.extf %7 : vector<8x32xbf16> to vector<8x32xf32>
    %9 = arith.addf %6, %8 : vector<8x32xf32>
    %10 = arith.truncf %9 : vector<8x32xf32> to vector<8x32xbf16>
    %c0_7 = arith.constant 0 : index
    %c0_8 = arith.constant 0 : index
    %11 = vector.load %arg6[%c0_7, %c0_8] : memref<8x32xbf16, #tpu.memory_space<vmem>>, vector<8x32xbf16>
    tpu.vector_store %arg6[%c0_7, %c0_8], %10 {strides = array<i32>} : memref<8x32xbf16, #tpu.memory_space<vmem>>, vector<8x32xbf16>,
    return
  }
  func.func @transform_0(%arg0: i32, %arg1: i32) -> (i32, i32) {
    %c0_i32 = arith.constant 0 : i32
    %c0_i32_0 = arith.constant 0 : i32
    return %arg1, %c0_i32 : i32, i32
  }
  func.func @transform_1(%arg0: i32, %arg1: i32) -> (i32, i32) {
    %c0_i32 = arith.constant 0 : i32
    %c0_i32_0 = arith.constant 0 : i32
    return %c0_i32, %arg0 : i32, i32
  }
  func.func @transform_2(%arg0: i32, %arg1: i32) -> (i32, i32) {
    %c0_i32 = arith.constant 0 : i32
    %c0_i32_0 = arith.constant 0 : i32
    return %c0_i32, %arg0 : i32, i32
  }
  func.func @transform_3(%arg0: i32, %arg1: i32) -> (i32, i32) {
    %c0_i32 = arith.constant 0 : i32
    return %arg1, %arg0 : i32, i32
  }
  func.func @transform_4(%arg0: i32, %arg1: i32) -> (i32, i32) {
    %c0_i32 = arith.constant 0 : i32
    return %arg1, %arg0 : i32, i32
  }
}

module attributes {stable_mosaic.version = 11 : i64} {
  func.func @_matmul_kernel(%arg0: i32, %arg1: i32, %arg2: memref<8x32xbf16, #tpu.memory_space<vmem>>, %arg3: memref<32x96xbf16, #tpu.memory_space<vmem>>, %arg4: memref<1x96xbf16, #tpu.memory_space<vmem>>, %arg5: memref<1x32xbf16, #tpu.memory_space<vmem>>, %arg6: memref<1x32xbf16, #tpu.memory_space<vmem>>, %arg7: memref<8x96xbf16, #tpu.memory_space<vmem>>) attributes {dimension_semantics = [#tpu.dimension_semantics<parallel>, #tpu.dimension_semantics<parallel>], iteration_bounds = array<i64: 1, 1>, scalar_prefetch = 0 : i64, scratch_operands = 0 : i64, tpu.core_type = #tpu.core_type<tc>, window_params = [{transform_indices = @transform_0, window_bounds = array<i64: 8, 32>}, {transform_indices = @transform_1, window_bounds = array<i64: 32, 96>}, {transform_indices = @transform_2, window_bounds = array<i64: 1, 96>}, {pipeline_mode = #tpu.pipeline_mode<synchronous>, transform_indices = @transform_3, window_bounds = array<i64: 1, 32>}, {pipeline_mode = #tpu.pipeline_mode<synchronous>, transform_indices = @transform_4, window_bounds = array<i64: 1, 32>}, {transform_indices = @transform_5, window_bounds = array<i64: 8, 96>}]} {
    %c0 = arith.constant 0 : index
    %c0_0 = arith.constant 0 : index
    %0 = vector.load %arg2[%c0, %c0_0] : memref<8x32xbf16, #tpu.memory_space<vmem>>, vector<8x32xbf16>
    %1 = arith.extf %0 : vector<8x32xbf16> to vector<8x32xf32>
    %cst = arith.constant dense<0.000000e+00> : vector<8xf32>
    %2 = vector.multi_reduction <add>, %1, %cst [1] : vector<8x32xf32> to vector<8xf32>
    %3 = vector.shape_cast %2 : vector<8xf32> to vector<8x1xf32>
    %cst_1 = arith.constant 3.200000e+01 : f32
    %4 = vector.broadcast %cst_1 : f32 to vector<8x1xf32>
    %5 = arith.divf %3, %4 : vector<8x1xf32>
    %6 = vector.broadcast %5 : vector<8x1xf32> to vector<8x32xf32>
    %7 = arith.subf %1, %6 : vector<8x32xf32>
    %8 = arith.mulf %7, %7 : vector<8x32xf32>
    %cst_2 = arith.constant dense<0.000000e+00> : vector<8xf32>
    %9 = vector.multi_reduction <add>, %8, %cst_2 [1] : vector<8x32xf32> to vector<8xf32>
    %10 = vector.shape_cast %9 : vector<8xf32> to vector<8x1xf32>
    %cst_3 = arith.constant 3.200000e+01 : f32
    %11 = vector.broadcast %cst_3 : f32 to vector<8x1xf32>
    %12 = arith.divf %10, %11 : vector<8x1xf32>
    %13 = vector.broadcast %5 : vector<8x1xf32> to vector<8x32xf32>
    %14 = arith.subf %1, %13 : vector<8x32xf32>
    %cst_4 = arith.constant 9.99999997E-7 : f32
    %15 = vector.broadcast %cst_4 : f32 to vector<8x1xf32>
    %16 = arith.addf %12, %15 : vector<8x1xf32>
    %17 = math.rsqrt %16 : vector<8x1xf32>
    %18 = vector.broadcast %17 : vector<8x1xf32> to vector<8x32xf32>
    %19 = arith.mulf %14, %18 : vector<8x32xf32>
    %c0_5 = arith.constant 0 : index
    %c0_6 = arith.constant 0 : index
    %20 = vector.load %arg5[%c0_5, %c0_6] : memref<1x32xbf16, #tpu.memory_space<vmem>>, vector<1x32xbf16>
    %21 = arith.extf %20 : vector<1x32xbf16> to vector<1x32xf32>
    %22 = vector.broadcast %21 : vector<1x32xf32> to vector<8x32xf32>
    %23 = arith.mulf %19, %22 : vector<8x32xf32>
    %c0_7 = arith.constant 0 : index
    %c0_8 = arith.constant 0 : index
    %24 = vector.load %arg6[%c0_7, %c0_8] : memref<1x32xbf16, #tpu.memory_space<vmem>>, vector<1x32xbf16>
    %25 = arith.extf %24 : vector<1x32xbf16> to vector<1x32xf32>
    %26 = vector.broadcast %25 : vector<1x32xf32> to vector<8x32xf32>
    %27 = arith.addf %23, %26 : vector<8x32xf32>
    %28 = arith.truncf %27 : vector<8x32xf32> to vector<8x32xbf16>
    %c0_9 = arith.constant 0 : index
    %c0_10 = arith.constant 0 : index
    %29 = vector.load %arg3[%c0_9, %c0_10] : memref<32x96xbf16, #tpu.memory_space<vmem>>, vector<32x96xbf16>
    %cst_11 = arith.constant dense<0.000000e+00> : vector<8x96xf32>
    %30 = tpu.matmul %28, %29, %cst_11 {dimension_numbers = #tpu.dot_dimension_numbers<[1], [0], [0], [1], [0, 0, 1, 1], [], []>} : vector<8x32xbf16>, vector<32x96xbf16>, vector<8x96xf32> -> vector<8x96xf32>
    %c0_12 = arith.constant 0 : index
    %c0_13 = arith.constant 0 : index
    %31 = vector.load %arg4[%c0_12, %c0_13] : memref<1x96xbf16, #tpu.memory_space<vmem>>, vector<1x96xbf16>
    %32 = arith.extf %31 : vector<1x96xbf16> to vector<1x96xf32>
    %33 = vector.broadcast %32 : vector<1x96xf32> to vector<8x96xf32>
    %34 = arith.addf %30, %33 : vector<8x96xf32>
    %35 = arith.truncf %34 : vector<8x96xf32> to vector<8x96xbf16>
    %c0_14 = arith.constant 0 : index
    %c0_15 = arith.constant 0 : index
    %36 = vector.load %arg7[%c0_14, %c0_15] : memref<8x96xbf16, #tpu.memory_space<vmem>>, vector<8x96xbf16>
    tpu.vector_store %arg7[%c0_14, %c0_15], %35 {strides = array<i32>} : memref<8x96xbf16, #tpu.memory_space<vmem>>, vector<8x96xbf16>,
    return
  }
  func.func @transform_0(%arg0: i32, %arg1: i32) -> (i32, i32) {
    %c0_i32 = arith.constant 0 : i32
    %c0_i32_0 = arith.constant 0 : i32
    return %arg1, %c0_i32 : i32, i32
  }
  func.func @transform_1(%arg0: i32, %arg1: i32) -> (i32, i32) {
    %c0_i32 = arith.constant 0 : i32
    %c0_i32_0 = arith.constant 0 : i32
    return %c0_i32, %arg0 : i32, i32
  }
  func.func @transform_2(%arg0: i32, %arg1: i32) -> (i32, i32) {
    %c0_i32 = arith.constant 0 : i32
    %c0_i32_0 = arith.constant 0 : i32
    return %c0_i32, %arg0 : i32, i32
  }
  func.func @transform_3(%arg0: i32, %arg1: i32) -> (i32, i32) {
    %c0_i32 = arith.constant 0 : i32
    %c0_i32_0 = arith.constant 0 : i32
    %c0_i32_1 = arith.constant 0 : i32
    return %c0_i32, %c0_i32_0 : i32, i32
  }
  func.func @transform_4(%arg0: i32, %arg1: i32) -> (i32, i32) {
    %c0_i32 = arith.constant 0 : i32
    %c0_i32_0 = arith.constant 0 : i32
    %c0_i32_1 = arith.constant 0 : i32
    return %c0_i32, %c0_i32_0 : i32, i32
  }
  func.func @transform_5(%arg0: i32, %arg1: i32) -> (i32, i32) {
    %c0_i32 = arith.constant 0 : i32
    return %arg1, %arg0 : i32, i32
  }
}

module attributes {stable_mosaic.version = 11 : i64} {
  func.func @_patch_embed_kernel(%arg0: i32, %arg1: memref<1x4x192xbf16, #tpu.memory_space<vmem>>, %arg2: memref<192x32xbf16, #tpu.memory_space<vmem>>, %arg3: memref<1x32xbf16, #tpu.memory_space<vmem>>, %arg4: memref<4x32xbf16, #tpu.memory_space<vmem>>, %arg5: memref<1x4x32xbf16, #tpu.memory_space<vmem>>) attributes {dimension_semantics = [#tpu.dimension_semantics<parallel>], iteration_bounds = array<i64: 2>, scalar_prefetch = 0 : i64, scratch_operands = 0 : i64, tpu.core_type = #tpu.core_type<tc>, window_params = [{transform_indices = @transform_0, window_bounds = array<i64: 1, 4, 192>}, {pipeline_mode = #tpu.pipeline_mode<synchronous>, transform_indices = @transform_1, window_bounds = array<i64: 192, 32>}, {pipeline_mode = #tpu.pipeline_mode<synchronous>, transform_indices = @transform_2, window_bounds = array<i64: 1, 32>}, {pipeline_mode = #tpu.pipeline_mode<synchronous>, transform_indices = @transform_3, window_bounds = array<i64: 4, 32>}, {transform_indices = @transform_4, window_bounds = array<i64: 1, 4, 32>}]} {
    %c0 = arith.constant 0 : index
    %c0_0 = arith.constant 0 : index
    %c0_1 = arith.constant 0 : index
    %0 = vector.load %arg1[%c0, %c0_0, %c0_1] : memref<1x4x192xbf16, #tpu.memory_space<vmem>>, vector<1x4x192xbf16>
    %1 = vector.shape_cast %0 : vector<1x4x192xbf16> to vector<4x192xbf16>
    %c0_2 = arith.constant 0 : index
    %c0_3 = arith.constant 0 : index
    %2 = vector.load %arg2[%c0_2, %c0_3] : memref<192x32xbf16, #tpu.memory_space<vmem>>, vector<192x32xbf16>
    %cst = arith.constant dense<0.000000e+00> : vector<4x32xf32>
    %3 = tpu.matmul %1, %2, %cst {dimension_numbers = #tpu.dot_dimension_numbers<[1], [0], [0], [1], [0, 0, 1, 1], [], []>} : vector<4x192xbf16>, vector<192x32xbf16>, vector<4x32xf32> -> vector<4x32xf32>
    %c0_4 = arith.constant 0 : index
    %c0_5 = arith.constant 0 : index
    %4 = vector.load %arg3[%c0_4, %c0_5] : memref<1x32xbf16, #tpu.memory_space<vmem>>, vector<1x32xbf16>
    %5 = arith.extf %4 : vector<1x32xbf16> to vector<1x32xf32>
    %6 = vector.broadcast %5 : vector<1x32xf32> to vector<4x32xf32>
    %7 = arith.addf %3, %6 : vector<4x32xf32>
    %c0_6 = arith.constant 0 : index
    %c0_7 = arith.constant 0 : index
    %8 = vector.load %arg4[%c0_6, %c0_7] : memref<4x32xbf16, #tpu.memory_space<vmem>>, vector<4x32xbf16>
    %9 = arith.extf %8 : vector<4x32xbf16> to vector<4x32xf32>
    %10 = arith.addf %7, %9 : vector<4x32xf32>
    %11 = arith.truncf %10 : vector<4x32xf32> to vector<4x32xbf16>
    %c0_8 = arith.constant 0 : index
    %c0_9 = arith.constant 0 : index
    %c0_10 = arith.constant 0 : index
    %12 = vector.load %arg5[%c0_8, %c0_9, %c0_10] : memref<1x4x32xbf16, #tpu.memory_space<vmem>>, vector<1x4x32xbf16>
    %13 = vector.shape_cast %12 : vector<1x4x32xbf16> to vector<4x32xbf16>
    %14 = vector.shape_cast %11 : vector<4x32xbf16> to vector<1x4x32xbf16>
    tpu.vector_store %arg5[%c0_8, %c0_9, %c0_10], %14 {strides = array<i32>} : memref<1x4x32xbf16, #tpu.memory_space<vmem>>, vector<1x4x32xbf16>,
    return
  }
  func.func @transform_0(%arg0: i32) -> (i32, i32, i32) {
    %c0_i32 = arith.constant 0 : i32
    %c0_i32_0 = arith.constant 0 : i32
    %c0_i32_1 = arith.constant 0 : i32
    return %arg0, %c0_i32, %c0_i32_0 : i32, i32, i32
  }
  func.func @transform_1(%arg0: i32) -> (i32, i32) {
    %c0_i32 = arith.constant 0 : i32
    %c0_i32_0 = arith.constant 0 : i32
    %c0_i32_1 = arith.constant 0 : i32
    return %c0_i32, %c0_i32_0 : i32, i32
  }
  func.func @transform_2(%arg0: i32) -> (i32, i32) {
    %c0_i32 = arith.constant 0 : i32
    %c0_i32_0 = arith.constant 0 : i32
    %c0_i32_1 = arith.constant 0 : i32
    return %c0_i32, %c0_i32_0 : i32, i32
  }
  func.func @transform_3(%arg0: i32) -> (i32, i32) {
    %c0_i32 = arith.constant 0 : i32
    %c0_i32_0 = arith.constant 0 : i32
    %c0_i32_1 = arith.constant 0 : i32
    return %c0_i32, %c0_i32_0 : i32, i32
  }
  func.func @transform_4(%arg0: i32) -> (i32, i32, i32) {
    %c0_i32 = arith.constant 0 : i32
    %c0_i32_0 = arith.constant 0 : i32
    %c0_i32_1 = arith.constant 0 : i32
    return %arg0, %c0_i32, %c0_i32_0 : i32, i32, i32
  }
}

module attributes {stable_mosaic.version = 11 : i64} {
  func.func @_attention_kernel(%arg0: i32, %arg1: memref<1x4x96xbf16, #tpu.memory_space<vmem>>, %arg2: memref<1x4x32xbf16, #tpu.memory_space<vmem>>) attributes {dimension_semantics = [#tpu.dimension_semantics<parallel>], iteration_bounds = array<i64: 2>, scalar_prefetch = 0 : i64, scratch_operands = 0 : i64, tpu.core_type = #tpu.core_type<tc>, window_params = [{transform_indices = @transform_0, window_bounds = array<i64: 1, 4, 96>}, {transform_indices = @transform_1, window_bounds = array<i64: 1, 4, 32>}]} {
    %c0 = arith.constant 0 : index
    %c0_0 = arith.constant 0 : index
    %c0_1 = arith.constant 0 : index
    %0 = vector.load %arg1[%c0, %c0_0, %c0_1] : memref<1x4x96xbf16, #tpu.memory_space<vmem>>, vector<1x4x8xbf16>
    %1 = vector.shape_cast %0 : vector<1x4x8xbf16> to vector<4x8xbf16>
    %c0_2 = arith.constant 0 : index
    %c0_3 = arith.constant 0 : index
    %c32 = arith.constant 32 : index
    %2 = vector.load %arg1[%c0_2, %c0_3, %c32] : memref<1x4x96xbf16, #tpu.memory_space<vmem>>, vector<1x4x8xbf16>
    %3 = vector.shape_cast %2 : vector<1x4x8xbf16> to vector<4x8xbf16>
    %c0_4 = arith.constant 0 : index
    %c0_5 = arith.constant 0 : index
    %c64 = arith.constant 64 : index
    %4 = vector.load %arg1[%c0_4, %c0_5, %c64] : memref<1x4x96xbf16, #tpu.memory_space<vmem>>, vector<1x4x8xbf16>
    %5 = vector.shape_cast %4 : vector<1x4x8xbf16> to vector<4x8xbf16>
    %cst = arith.constant dense<0.000000e+00> : vector<4x4xf32>
    %6 = tpu.matmul %1, %3, %cst {dimension_numbers = #tpu.dot_dimension_numbers<[1], [1], [0], [0], [0, 0, 1, 0], [], []>} : vector<4x8xbf16>, vector<4x8xbf16>, vector<4x4xf32> -> vector<4x4xf32>
    %cst_6 = arith.constant 0.353553385 : f32
    %7 = vector.broadcast %cst_6 : f32 to vector<4x4xf32>
    %8 = arith.mulf %6, %7 : vector<4x4xf32>
    %cst_7 = arith.constant dense<0xFF800000> : vector<4xf32>
    %9 = vector.multi_reduction <maximumf>, %8, %cst_7 [1] : vector<4x4xf32> to vector<4xf32>
    %10 = vector.shape_cast %9 : vector<4xf32> to vector<4x1xf32>
    %11 = vector.broadcast %10 : vector<4x1xf32> to vector<4x4xf32>
    %12 = arith.subf %8, %11 : vector<4x4xf32>
    %13 = math.exp %12 : vector<4x4xf32>
    %cst_8 = arith.constant dense<0.000000e+00> : vector<4xf32>
    %14 = vector.multi_reduction <add>, %13, %cst_8 [1] : vector<4x4xf32> to vector<4xf32>
    %15 = vector.shape_cast %14 : vector<4xf32> to vector<4x1xf32>
    %16 = arith.truncf %13 : vector<4x4xf32> to vector<4x4xbf16>
    %cst_9 = arith.constant dense<0.000000e+00> : vector<4x8xf32>
    %17 = tpu.matmul %16, %5, %cst_9 {dimension_numbers = #tpu.dot_dimension_numbers<[1], [0], [0], [1], [0, 0, 1, 1], [], []>} : vector<4x4xbf16>, vector<4x8xbf16>, vector<4x8xf32> -> vector<4x8xf32>
    %18 = vector.broadcast %15 : vector<4x1xf32> to vector<4x8xf32>
    %19 = arith.divf %17, %18 : vector<4x8xf32>
    %20 = arith.truncf %19 : vector<4x8xf32> to vector<4x8xbf16>
    %c0_10 = arith.constant 0 : index
    %c0_11 = arith.constant 0 : index
    %c0_12 = arith.constant 0 : index
    %21 = vector.load %arg2[%c0_10, %c0_11, %c0_12] : memref<1x4x32xbf16, #tpu.memory_space<vmem>>, vector<1x4x8xbf16>
    %22 = vector.shape_cast %21 : vector<1x4x8xbf16> to vector<4x8xbf16>
    %23 = vector.shape_cast %20 : vector<4x8xbf16> to vector<1x4x8xbf16>
    tpu.vector_store %arg2[%c0_10, %c0_11, %c0_12], %23 {strides = array<i32>} : memref<1x4x32xbf16, #tpu.memory_space<vmem>>, vector<1x4x8xbf16>,
    %c0_13 = arith.constant 0 : index
    %c0_14 = arith.constant 0 : index
    %c8 = arith.constant 8 : index
    %24 = vector.load %arg1[%c0_13, %c0_14, %c8] : memref<1x4x96xbf16, #tpu.memory_space<vmem>>, vector<1x4x8xbf16>
    %25 = vector.shape_cast %24 : vector<1x4x8xbf16> to vector<4x8xbf16>
    %c0_15 = arith.constant 0 : index
    %c0_16 = arith.constant 0 : index
    %c40 = arith.constant 40 : index
    %26 = vector.load %arg1[%c0_15, %c0_16, %c40] : memref<1x4x96xbf16, #tpu.memory_space<vmem>>, vector<1x4x8xbf16>
    %27 = vector.shape_cast %26 : vector<1x4x8xbf16> to vector<4x8xbf16>
    %c0_17 = arith.constant 0 : index
    %c0_18 = arith.constant 0 : index
    %c72 = arith.constant 72 : index
    %28 = vector.load %arg1[%c0_17, %c0_18, %c72] : memref<1x4x96xbf16, #tpu.memory_space<vmem>>, vector<1x4x8xbf16>
    %29 = vector.shape_cast %28 : vector<1x4x8xbf16> to vector<4x8xbf16>
    %cst_19 = arith.constant dense<0.000000e+00> : vector<4x4xf32>
    %30 = tpu.matmul %25, %27, %cst_19 {dimension_numbers = #tpu.dot_dimension_numbers<[1], [1], [0], [0], [0, 0, 1, 0], [], []>} : vector<4x8xbf16>, vector<4x8xbf16>, vector<4x4xf32> -> vector<4x4xf32>
    %cst_20 = arith.constant 0.353553385 : f32
    %31 = vector.broadcast %cst_20 : f32 to vector<4x4xf32>
    %32 = arith.mulf %30, %31 : vector<4x4xf32>
    %cst_21 = arith.constant dense<0xFF800000> : vector<4xf32>
    %33 = vector.multi_reduction <maximumf>, %32, %cst_21 [1] : vector<4x4xf32> to vector<4xf32>
    %34 = vector.shape_cast %33 : vector<4xf32> to vector<4x1xf32>
    %35 = vector.broadcast %34 : vector<4x1xf32> to vector<4x4xf32>
    %36 = arith.subf %32, %35 : vector<4x4xf32>
    %37 = math.exp %36 : vector<4x4xf32>
    %cst_22 = arith.constant dense<0.000000e+00> : vector<4xf32>
    %38 = vector.multi_reduction <add>, %37, %cst_22 [1] : vector<4x4xf32> to vector<4xf32>
    %39 = vector.shape_cast %38 : vector<4xf32> to vector<4x1xf32>
    %40 = arith.truncf %37 : vector<4x4xf32> to vector<4x4xbf16>
    %cst_23 = arith.constant dense<0.000000e+00> : vector<4x8xf32>
    %41 = tpu.matmul %40, %29, %cst_23 {dimension_numbers = #tpu.dot_dimension_numbers<[1], [0], [0], [1], [0, 0, 1, 1], [], []>} : vector<4x4xbf16>, vector<4x8xbf16>, vector<4x8xf32> -> vector<4x8xf32>
    %42 = vector.broadcast %39 : vector<4x1xf32> to vector<4x8xf32>
    %43 = arith.divf %41, %42 : vector<4x8xf32>
    %44 = arith.truncf %43 : vector<4x8xf32> to vector<4x8xbf16>
    %c0_24 = arith.constant 0 : index
    %c0_25 = arith.constant 0 : index
    %c8_26 = arith.constant 8 : index
    %45 = vector.load %arg2[%c0_24, %c0_25, %c8_26] : memref<1x4x32xbf16, #tpu.memory_space<vmem>>, vector<1x4x8xbf16>
    %46 = vector.shape_cast %45 : vector<1x4x8xbf16> to vector<4x8xbf16>
    %47 = vector.shape_cast %44 : vector<4x8xbf16> to vector<1x4x8xbf16>
    tpu.vector_store %arg2[%c0_24, %c0_25, %c8_26], %47 {strides = array<i32>} : memref<1x4x32xbf16, #tpu.memory_space<vmem>>, vector<1x4x8xbf16>,
    %c0_27 = arith.constant 0 : index
    %c0_28 = arith.constant 0 : index
    %c16 = arith.constant 16 : index
    %48 = vector.load %arg1[%c0_27, %c0_28, %c16] : memref<1x4x96xbf16, #tpu.memory_space<vmem>>, vector<1x4x8xbf16>
    %49 = vector.shape_cast %48 : vector<1x4x8xbf16> to vector<4x8xbf16>
    %c0_29 = arith.constant 0 : index
    %c0_30 = arith.constant 0 : index
    %c48 = arith.constant 48 : index
    %50 = vector.load %arg1[%c0_29, %c0_30, %c48] : memref<1x4x96xbf16, #tpu.memory_space<vmem>>, vector<1x4x8xbf16>
    %51 = vector.shape_cast %50 : vector<1x4x8xbf16> to vector<4x8xbf16>
    %c0_31 = arith.constant 0 : index
    %c0_32 = arith.constant 0 : index
    %c80 = arith.constant 80 : index
    %52 = vector.load %arg1[%c0_31, %c0_32, %c80] : memref<1x4x96xbf16, #tpu.memory_space<vmem>>, vector<1x4x8xbf16>
    %53 = vector.shape_cast %52 : vector<1x4x8xbf16> to vector<4x8xbf16>
    %cst_33 = arith.constant dense<0.000000e+00> : vector<4x4xf32>
    %54 = tpu.matmul %49, %51, %cst_33 {dimension_numbers = #tpu.dot_dimension_numbers<[1], [1], [0], [0], [0, 0, 1, 0], [], []>} : vector<4x8xbf16>, vector<4x8xbf16>, vector<4x4xf32> -> vector<4x4xf32>
    %cst_34 = arith.constant 0.353553385 : f32
    %55 = vector.broadcast %cst_34 : f32 to vector<4x4xf32>
    %56 = arith.mulf %54, %55 : vector<4x4xf32>
    %cst_35 = arith.constant dense<0xFF800000> : vector<4xf32>
    %57 = vector.multi_reduction <maximumf>, %56, %cst_35 [1] : vector<4x4xf32> to vector<4xf32>
    %58 = vector.shape_cast %57 : vector<4xf32> to vector<4x1xf32>
    %59 = vector.broadcast %58 : vector<4x1xf32> to vector<4x4xf32>
    %60 = arith.subf %56, %59 : vector<4x4xf32>
    %61 = math.exp %60 : vector<4x4xf32>
    %cst_36 = arith.constant dense<0.000000e+00> : vector<4xf32>
    %62 = vector.multi_reduction <add>, %61, %cst_36 [1] : vector<4x4xf32> to vector<4xf32>
    %63 = vector.shape_cast %62 : vector<4xf32> to vector<4x1xf32>
    %64 = arith.truncf %61 : vector<4x4xf32> to vector<4x4xbf16>
    %cst_37 = arith.constant dense<0.000000e+00> : vector<4x8xf32>
    %65 = tpu.matmul %64, %53, %cst_37 {dimension_numbers = #tpu.dot_dimension_numbers<[1], [0], [0], [1], [0, 0, 1, 1], [], []>} : vector<4x4xbf16>, vector<4x8xbf16>, vector<4x8xf32> -> vector<4x8xf32>
    %66 = vector.broadcast %63 : vector<4x1xf32> to vector<4x8xf32>
    %67 = arith.divf %65, %66 : vector<4x8xf32>
    %68 = arith.truncf %67 : vector<4x8xf32> to vector<4x8xbf16>
    %c0_38 = arith.constant 0 : index
    %c0_39 = arith.constant 0 : index
    %c16_40 = arith.constant 16 : index
    %69 = vector.load %arg2[%c0_38, %c0_39, %c16_40] : memref<1x4x32xbf16, #tpu.memory_space<vmem>>, vector<1x4x8xbf16>
    %70 = vector.shape_cast %69 : vector<1x4x8xbf16> to vector<4x8xbf16>
    %71 = vector.shape_cast %68 : vector<4x8xbf16> to vector<1x4x8xbf16>
    tpu.vector_store %arg2[%c0_38, %c0_39, %c16_40], %71 {strides = array<i32>} : memref<1x4x32xbf16, #tpu.memory_space<vmem>>, vector<1x4x8xbf16>,
    %c0_41 = arith.constant 0 : index
    %c0_42 = arith.constant 0 : index
    %c24 = arith.constant 24 : index
    %72 = vector.load %arg1[%c0_41, %c0_42, %c24] : memref<1x4x96xbf16, #tpu.memory_space<vmem>>, vector<1x4x8xbf16>
    %73 = vector.shape_cast %72 : vector<1x4x8xbf16> to vector<4x8xbf16>
    %c0_43 = arith.constant 0 : index
    %c0_44 = arith.constant 0 : index
    %c56 = arith.constant 56 : index
    %74 = vector.load %arg1[%c0_43, %c0_44, %c56] : memref<1x4x96xbf16, #tpu.memory_space<vmem>>, vector<1x4x8xbf16>
    %75 = vector.shape_cast %74 : vector<1x4x8xbf16> to vector<4x8xbf16>
    %c0_45 = arith.constant 0 : index
    %c0_46 = arith.constant 0 : index
    %c88 = arith.constant 88 : index
    %76 = vector.load %arg1[%c0_45, %c0_46, %c88] : memref<1x4x96xbf16, #tpu.memory_space<vmem>>, vector<1x4x8xbf16>
    %77 = vector.shape_cast %76 : vector<1x4x8xbf16> to vector<4x8xbf16>
    %cst_47 = arith.constant dense<0.000000e+00> : vector<4x4xf32>
    %78 = tpu.matmul %73, %75, %cst_47 {dimension_numbers = #tpu.dot_dimension_numbers<[1], [1], [0], [0], [0, 0, 1, 0], [], []>} : vector<4x8xbf16>, vector<4x8xbf16>, vector<4x4xf32> -> vector<4x4xf32>
    %cst_48 = arith.constant 0.353553385 : f32
    %79 = vector.broadcast %cst_48 : f32 to vector<4x4xf32>
    %80 = arith.mulf %78, %79 : vector<4x4xf32>
    %cst_49 = arith.constant dense<0xFF800000> : vector<4xf32>
    %81 = vector.multi_reduction <maximumf>, %80, %cst_49 [1] : vector<4x4xf32> to vector<4xf32>
    %82 = vector.shape_cast %81 : vector<4xf32> to vector<4x1xf32>
    %83 = vector.broadcast %82 : vector<4x1xf32> to vector<4x4xf32>
    %84 = arith.subf %80, %83 : vector<4x4xf32>
    %85 = math.exp %84 : vector<4x4xf32>
    %cst_50 = arith.constant dense<0.000000e+00> : vector<4xf32>
    %86 = vector.multi_reduction <add>, %85, %cst_50 [1] : vector<4x4xf32> to vector<4xf32>
    %87 = vector.shape_cast %86 : vector<4xf32> to vector<4x1xf32>
    %88 = arith.truncf %85 : vector<4x4xf32> to vector<4x4xbf16>
    %cst_51 = arith.constant dense<0.000000e+00> : vector<4x8xf32>
    %89 = tpu.matmul %88, %77, %cst_51 {dimension_numbers = #tpu.dot_dimension_numbers<[1], [0], [0], [1], [0, 0, 1, 1], [], []>} : vector<4x4xbf16>, vector<4x8xbf16>, vector<4x8xf32> -> vector<4x8xf32>
    %90 = vector.broadcast %87 : vector<4x1xf32> to vector<4x8xf32>
    %91 = arith.divf %89, %90 : vector<4x8xf32>
    %92 = arith.truncf %91 : vector<4x8xf32> to vector<4x8xbf16>
    %c0_52 = arith.constant 0 : index
    %c0_53 = arith.constant 0 : index
    %c24_54 = arith.constant 24 : index
    %93 = vector.load %arg2[%c0_52, %c0_53, %c24_54] : memref<1x4x32xbf16, #tpu.memory_space<vmem>>, vector<1x4x8xbf16>
    %94 = vector.shape_cast %93 : vector<1x4x8xbf16> to vector<4x8xbf16>
    %95 = vector.shape_cast %92 : vector<4x8xbf16> to vector<1x4x8xbf16>
    tpu.vector_store %arg2[%c0_52, %c0_53, %c24_54], %95 {strides = array<i32>} : memref<1x4x32xbf16, #tpu.memory_space<vmem>>, vector<1x4x8xbf16>,
    return
  }
  func.func @transform_0(%arg0: i32) -> (i32, i32, i32) {
    %c0_i32 = arith.constant 0 : i32
    %c0_i32_0 = arith.constant 0 : i32
    %c0_i32_1 = arith.constant 0 : i32
    return %arg0, %c0_i32, %c0_i32_0 : i32, i32, i32
  }
  func.func @transform_1(%arg0: i32) -> (i32, i32, i32) {
    %c0_i32 = arith.constant 0 : i32
    %c0_i32_0 = arith.constant 0 : i32
    %c0_i32_1 = arith.constant 0 : i32
    return %arg0, %c0_i32, %c0_i32_0 : i32, i32, i32
  }
}

module attributes {stable_mosaic.version = 11 : i64} {
  func.func @_matmul_kernel(%arg0: i32, %arg1: i32, %arg2: memref<8x32xbf16, #tpu.memory_space<vmem>>, %arg3: memref<32x64xbf16, #tpu.memory_space<vmem>>, %arg4: memref<1x64xbf16, #tpu.memory_space<vmem>>, %arg5: memref<1x32xbf16, #tpu.memory_space<vmem>>, %arg6: memref<1x32xbf16, #tpu.memory_space<vmem>>, %arg7: memref<8x64xbf16, #tpu.memory_space<vmem>>) attributes {dimension_semantics = [#tpu.dimension_semantics<parallel>, #tpu.dimension_semantics<parallel>], iteration_bounds = array<i64: 1, 1>, scalar_prefetch = 0 : i64, scratch_operands = 0 : i64, tpu.core_type = #tpu.core_type<tc>, window_params = [{transform_indices = @transform_0, window_bounds = array<i64: 8, 32>}, {transform_indices = @transform_1, window_bounds = array<i64: 32, 64>}, {transform_indices = @transform_2, window_bounds = array<i64: 1, 64>}, {pipeline_mode = #tpu.pipeline_mode<synchronous>, transform_indices = @transform_3, window_bounds = array<i64: 1, 32>}, {pipeline_mode = #tpu.pipeline_mode<synchronous>, transform_indices = @transform_4, window_bounds = array<i64: 1, 32>}, {transform_indices = @transform_5, window_bounds = array<i64: 8, 64>}]} {
    %c0 = arith.constant 0 : index
    %c0_0 = arith.constant 0 : index
    %0 = vector.load %arg2[%c0, %c0_0] : memref<8x32xbf16, #tpu.memory_space<vmem>>, vector<8x32xbf16>
    %1 = arith.extf %0 : vector<8x32xbf16> to vector<8x32xf32>
    %cst = arith.constant dense<0.000000e+00> : vector<8xf32>
    %2 = vector.multi_reduction <add>, %1, %cst [1] : vector<8x32xf32> to vector<8xf32>
    %3 = vector.shape_cast %2 : vector<8xf32> to vector<8x1xf32>
    %cst_1 = arith.constant 3.200000e+01 : f32
    %4 = vector.broadcast %cst_1 : f32 to vector<8x1xf32>
    %5 = arith.divf %3, %4 : vector<8x1xf32>
    %6 = vector.broadcast %5 : vector<8x1xf32> to vector<8x32xf32>
    %7 = arith.subf %1, %6 : vector<8x32xf32>
    %8 = arith.mulf %7, %7 : vector<8x32xf32>
    %cst_2 = arith.constant dense<0.000000e+00> : vector<8xf32>
    %9 = vector.multi_reduction <add>, %8, %cst_2 [1] : vector<8x32xf32> to vector<8xf32>
    %10 = vector.shape_cast %9 : vector<8xf32> to vector<8x1xf32>
    %cst_3 = arith.constant 3.200000e+01 : f32
    %11 = vector.broadcast %cst_3 : f32 to vector<8x1xf32>
    %12 = arith.divf %10, %11 : vector<8x1xf32>
    %13 = vector.broadcast %5 : vector<8x1xf32> to vector<8x32xf32>
    %14 = arith.subf %1, %13 : vector<8x32xf32>
    %cst_4 = arith.constant 9.99999997E-7 : f32
    %15 = vector.broadcast %cst_4 : f32 to vector<8x1xf32>
    %16 = arith.addf %12, %15 : vector<8x1xf32>
    %17 = math.rsqrt %16 : vector<8x1xf32>
    %18 = vector.broadcast %17 : vector<8x1xf32> to vector<8x32xf32>
    %19 = arith.mulf %14, %18 : vector<8x32xf32>
    %c0_5 = arith.constant 0 : index
    %c0_6 = arith.constant 0 : index
    %20 = vector.load %arg5[%c0_5, %c0_6] : memref<1x32xbf16, #tpu.memory_space<vmem>>, vector<1x32xbf16>
    %21 = arith.extf %20 : vector<1x32xbf16> to vector<1x32xf32>
    %22 = vector.broadcast %21 : vector<1x32xf32> to vector<8x32xf32>
    %23 = arith.mulf %19, %22 : vector<8x32xf32>
    %c0_7 = arith.constant 0 : index
    %c0_8 = arith.constant 0 : index
    %24 = vector.load %arg6[%c0_7, %c0_8] : memref<1x32xbf16, #tpu.memory_space<vmem>>, vector<1x32xbf16>
    %25 = arith.extf %24 : vector<1x32xbf16> to vector<1x32xf32>
    %26 = vector.broadcast %25 : vector<1x32xf32> to vector<8x32xf32>
    %27 = arith.addf %23, %26 : vector<8x32xf32>
    %28 = arith.truncf %27 : vector<8x32xf32> to vector<8x32xbf16>
    %c0_9 = arith.constant 0 : index
    %c0_10 = arith.constant 0 : index
    %29 = vector.load %arg3[%c0_9, %c0_10] : memref<32x64xbf16, #tpu.memory_space<vmem>>, vector<32x64xbf16>
    %cst_11 = arith.constant dense<0.000000e+00> : vector<8x64xf32>
    %30 = tpu.matmul %28, %29, %cst_11 {dimension_numbers = #tpu.dot_dimension_numbers<[1], [0], [0], [1], [0, 0, 1, 1], [], []>} : vector<8x32xbf16>, vector<32x64xbf16>, vector<8x64xf32> -> vector<8x64xf32>
    %c0_12 = arith.constant 0 : index
    %c0_13 = arith.constant 0 : index
    %31 = vector.load %arg4[%c0_12, %c0_13] : memref<1x64xbf16, #tpu.memory_space<vmem>>, vector<1x64xbf16>
    %32 = arith.extf %31 : vector<1x64xbf16> to vector<1x64xf32>
    %33 = vector.broadcast %32 : vector<1x64xf32> to vector<8x64xf32>
    %34 = arith.addf %30, %33 : vector<8x64xf32>
    %cst_14 = arith.constant 5.000000e-01 : f32
    %35 = vector.broadcast %cst_14 : f32 to vector<8x64xf32>
    %36 = arith.mulf %35, %34 : vector<8x64xf32>
    %cst_15 = arith.constant 4.471500e-02 : f32
    %37 = vector.broadcast %cst_15 : f32 to vector<8x64xf32>
    %38 = arith.mulf %37, %34 : vector<8x64xf32>
    %39 = arith.mulf %38, %34 : vector<8x64xf32>
    %40 = arith.mulf %39, %34 : vector<8x64xf32>
    %41 = arith.addf %34, %40 : vector<8x64xf32>
    %cst_16 = arith.constant 0.797884583 : f32
    %42 = vector.broadcast %cst_16 : f32 to vector<8x64xf32>
    %43 = arith.mulf %42, %41 : vector<8x64xf32>
    %44 = math.tanh %43 : vector<8x64xf32>
    %cst_17 = arith.constant 1.000000e+00 : f32
    %45 = vector.broadcast %cst_17 : f32 to vector<8x64xf32>
    %46 = arith.addf %45, %44 : vector<8x64xf32>
    %47 = arith.mulf %36, %46 : vector<8x64xf32>
    %48 = arith.truncf %47 : vector<8x64xf32> to vector<8x64xbf16>
    %c0_18 = arith.constant 0 : index
    %c0_19 = arith.constant 0 : index
    %49 = vector.load %arg7[%c0_18, %c0_19] : memref<8x64xbf16, #tpu.memory_space<vmem>>, vector<8x64xbf16>
    tpu.vector_store %arg7[%c0_18, %c0_19], %48 {strides = array<i32>} : memref<8x64xbf16, #tpu.memory_space<vmem>>, vector<8x64xbf16>,
    return
  }
  func.func @transform_0(%arg0: i32, %arg1: i32) -> (i32, i32) {
    %c0_i32 = arith.constant 0 : i32
    %c0_i32_0 = arith.constant 0 : i32
    return %arg1, %c0_i32 : i32, i32
  }
  func.func @transform_1(%arg0: i32, %arg1: i32) -> (i32, i32) {
    %c0_i32 = arith.constant 0 : i32
    %c0_i32_0 = arith.constant 0 : i32
    return %c0_i32, %arg0 : i32, i32
  }
  func.func @transform_2(%arg0: i32, %arg1: i32) -> (i32, i32) {
    %c0_i32 = arith.constant 0 : i32
    %c0_i32_0 = arith.constant 0 : i32
    return %c0_i32, %arg0 : i32, i32
  }
  func.func @transform_3(%arg0: i32, %arg1: i32) -> (i32, i32) {
    %c0_i32 = arith.constant 0 : i32
    %c0_i32_0 = arith.constant 0 : i32
    %c0_i32_1 = arith.constant 0 : i32
    return %c0_i32, %c0_i32_0 : i32, i32
  }
  func.func @transform_4(%arg0: i32, %arg1: i32) -> (i32, i32) {
    %c0_i32 = arith.constant 0 : i32
    %c0_i32_0 = arith.constant 0 : i32
    %c0_i32_1 = arith.constant 0 : i32
    return %c0_i32, %c0_i32_0 : i32, i32
  }
  func.func @transform_5(%arg0: i32, %arg1: i32) -> (i32, i32) {
    %c0_i32 = arith.constant 0 : i32
    return %arg1, %arg0 : i32, i32
  }
}

module attributes {stable_mosaic.version = 11 : i64} {
  func.func @_matmul_kernel(%arg0: i32, %arg1: i32, %arg2: memref<8x64xbf16, #tpu.memory_space<vmem>>, %arg3: memref<64x32xbf16, #tpu.memory_space<vmem>>, %arg4: memref<1x32xbf16, #tpu.memory_space<vmem>>, %arg5: memref<8x32xbf16, #tpu.memory_space<vmem>>, %arg6: memref<8x32xbf16, #tpu.memory_space<vmem>>) attributes {dimension_semantics = [#tpu.dimension_semantics<parallel>, #tpu.dimension_semantics<parallel>], iteration_bounds = array<i64: 1, 1>, scalar_prefetch = 0 : i64, scratch_operands = 0 : i64, tpu.core_type = #tpu.core_type<tc>, window_params = [{transform_indices = @transform_0, window_bounds = array<i64: 8, 64>}, {transform_indices = @transform_1, window_bounds = array<i64: 64, 32>}, {transform_indices = @transform_2, window_bounds = array<i64: 1, 32>}, {transform_indices = @transform_3, window_bounds = array<i64: 8, 32>}, {transform_indices = @transform_4, window_bounds = array<i64: 8, 32>}]} {
    %c0 = arith.constant 0 : index
    %c0_0 = arith.constant 0 : index
    %0 = vector.load %arg2[%c0, %c0_0] : memref<8x64xbf16, #tpu.memory_space<vmem>>, vector<8x64xbf16>
    %c0_1 = arith.constant 0 : index
    %c0_2 = arith.constant 0 : index
    %1 = vector.load %arg3[%c0_1, %c0_2] : memref<64x32xbf16, #tpu.memory_space<vmem>>, vector<64x32xbf16>
    %cst = arith.constant dense<0.000000e+00> : vector<8x32xf32>
    %2 = tpu.matmul %0, %1, %cst {dimension_numbers = #tpu.dot_dimension_numbers<[1], [0], [0], [1], [0, 0, 1, 1], [], []>} : vector<8x64xbf16>, vector<64x32xbf16>, vector<8x32xf32> -> vector<8x32xf32>
    %c0_3 = arith.constant 0 : index
    %c0_4 = arith.constant 0 : index
    %3 = vector.load %arg4[%c0_3, %c0_4] : memref<1x32xbf16, #tpu.memory_space<vmem>>, vector<1x32xbf16>
    %4 = arith.extf %3 : vector<1x32xbf16> to vector<1x32xf32>
    %5 = vector.broadcast %4 : vector<1x32xf32> to vector<8x32xf32>
    %6 = arith.addf %2, %5 : vector<8x32xf32>
    %c0_5 = arith.constant 0 : index
    %c0_6 = arith.constant 0 : index
    %7 = vector.load %arg5[%c0_5, %c0_6] : memref<8x32xbf16, #tpu.memory_space<vmem>>, vector<8x32xbf16>
    %8 = arith.extf %7 : vector<8x32xbf16> to vector<8x32xf32>
    %9 = arith.addf %6, %8 : vector<8x32xf32>
    %10 = arith.truncf %9 : vector<8x32xf32> to vector<8x32xbf16>
    %c0_7 = arith.constant 0 : index
    %c0_8 = arith.constant 0 : index
    %11 = vector.load %arg6[%c0_7, %c0_8] : memref<8x32xbf16, #tpu.memory_space<vmem>>, vector<8x32xbf16>
    tpu.vector_store %arg6[%c0_7, %c0_8], %10 {strides = array<i32>} : memref<8x32xbf16, #tpu.memory_space<vmem>>, vector<8x32xbf16>,
    return
  }
  func.func @transform_0(%arg0: i32, %arg1: i32) -> (i32, i32) {
    %c0_i32 = arith.constant 0 : i32
    %c0_i32_0 = arith.constant 0 : i32
    return %arg1, %c0_i32 : i32, i32
  }
  func.func @transform_1(%arg0: i32, %arg1: i32) -> (i32, i32) {
    %c0_i32 = arith.constant 0 : i32
    %c0_i32_0 = arith.constant 0 : i32
    return %c0_i32, %arg0 : i32, i32
  }
  func.func @transform_2(%arg0: i32, %arg1: i32) -> (i32, i32) {
    %c0_i32 = arith.constant 0 : i32
    %c0_i32_0 = arith.constant 0 : i32
    return %c0_i32, %arg0 : i32, i32
  }
  func.func @transform_3(%arg0: i32, %arg1: i32) -> (i32, i32) {
    %c0_i32 = arith.constant 0 : i32
    return %arg1, %arg0 : i32, i32
  }
  func.func @transform_4(%arg0: i32, %arg1: i32) -> (i32, i32) {
    %c0_i32 = arith.constant 0 : i32
    return %arg1, %arg0 : i32, i32
  }
}

module attributes {stable_mosaic.version = 11 : i64} {
  func.func @_matmul_kernel(%arg0: i32, %arg1: i32, %arg2: memref<6x32xbf16, #tpu.memory_space<vmem>>, %arg3: memref<32x32xbf16, #tpu.memory_space<vmem>>, %arg4: memref<1x32xbf16, #tpu.memory_space<vmem>>, %arg5: memref<6x32xf32, #tpu.memory_space<vmem>>) attributes {dimension_semantics = [#tpu.dimension_semantics<parallel>, #tpu.dimension_semantics<parallel>], iteration_bounds = array<i64: 1, 1>, scalar_prefetch = 0 : i64, scratch_operands = 0 : i64, tpu.core_type = #tpu.core_type<tc>, window_params = [{transform_indices = @transform_0, window_bounds = array<i64: 6, 32>}, {transform_indices = @transform_1, window_bounds = array<i64: 32, 32>}, {transform_indices = @transform_2, window_bounds = array<i64: 1, 32>}, {transform_indices = @transform_3, window_bounds = array<i64: 6, 32>}]} {
    %c0 = arith.constant 0 : index
    %c0_0 = arith.constant 0 : index
    %0 = vector.load %arg2[%c0, %c0_0] : memref<6x32xbf16, #tpu.memory_space<vmem>>, vector<6x32xbf16>
    %c0_1 = arith.constant 0 : index
    %c0_2 = arith.constant 0 : index
    %1 = vector.load %arg3[%c0_1, %c0_2] : memref<32x32xbf16, #tpu.memory_space<vmem>>, vector<32x32xbf16>
    %cst = arith.constant dense<0.000000e+00> : vector<6x32xf32>
    %2 = tpu.matmul %0, %1, %cst {dimension_numbers = #tpu.dot_dimension_numbers<[1], [0], [0], [1], [0, 0, 1, 1], [], []>} : vector<6x32xbf16>, vector<32x32xbf16>, vector<6x32xf32> -> vector<6x32xf32>
    %c0_3 = arith.constant 0 : index
    %c0_4 = arith.constant 0 : index
    %3 = vector.load %arg4[%c0_3, %c0_4] : memref<1x32xbf16, #tpu.memory_space<vmem>>, vector<1x32xbf16>
    %4 = arith.extf %3 : vector<1x32xbf16> to vector<1x32xf32>
    %5 = vector.broadcast %4 : vector<1x32xf32> to vector<6x32xf32>
    %6 = arith.addf %2, %5 : vector<6x32xf32>
    %c0_5 = arith.constant 0 : index
    %c0_6 = arith.constant 0 : index
    %7 = vector.load %arg5[%c0_5, %c0_6] : memref<6x32xf32, #tpu.memory_space<vmem>>, vector<6x32xf32>
    tpu.vector_store %arg5[%c0_5, %c0_6], %6 {strides = array<i32>} : memref<6x32xf32, #tpu.memory_space<vmem>>, vector<6x32xf32>,
    return
  }
  func.func @transform_0(%arg0: i32, %arg1: i32) -> (i32, i32) {
    %c0_i32 = arith.constant 0 : i32
    %c0_i32_0 = arith.constant 0 : i32
    return %arg1, %c0_i32 : i32, i32
  }
  func.func @transform_1(%arg0: i32, %arg1: i32) -> (i32, i32) {
    %c0_i32 = arith.constant 0 : i32
    %c0_i32_0 = arith.constant 0 : i32
    return %c0_i32, %arg0 : i32, i32
  }
  func.func @transform_2(%arg0: i32, %arg1: i32) -> (i32, i32) {
    %c0_i32 = arith.constant 0 : i32
    %c0_i32_0 = arith.constant 0 : i32
    return %c0_i32, %arg0 : i32, i32
  }
  func.func @transform_3(%arg0: i32, %arg1: i32) -> (i32, i32) {
    %c0_i32 = arith.constant 0 : i32
    return %arg1, %arg0 : i32, i32
  }
}

</mosaic_0001>

<llo_original>
// kernel: siglip_vision_tower_forward.13
$region0: #{siglip_vision_tower_forward.13}
  #allocation0 [shape = 'u32[]', space=smem, size = 0x4, offset = 0x4, fixed_abs, tag = 'smem constant byte address 0x4 - core index']
  #allocation1 [shape = 'u32[144,128]{1,0:T(1,128)}', space=vmem, size = 0x12000, scoped, tag = 'internal scratch']
  %s0 = inlined_call_operand.vmem [shape: bf16[8,32], index: 0, kind: input, shape index: {}]
  %s1 = inlined_call_operand.vmem [shape: bf16[32,96], index: 1, kind: input, shape index: {}]
  %s2 = inlined_call_operand.vmem [shape: bf16[1,96], index: 2, kind: input, shape index: {}]
  %s3 = inlined_call_operand.vmem [shape: bf16[1,32], index: 3, kind: input, shape index: {}]
  %s4 = inlined_call_operand.vmem [shape: bf16[1,32], index: 4, kind: input, shape index: {}]
  %s5 = inlined_call_operand.vmem [shape: bf16[8,96], index: 5, kind: output, shape index: {}]
  %s6 = sld [smem:[#allocation0]]
  $region30: #{siglip_vision_tower_forward.13} parent=0
    _
  %s8 = ssub.s32 1, %s6
  %s9 = scalar_select 0, %s8, %s6
  // Predicated region
  $region2: #{siglip_vision_tower_forward.13} parent=0 // pred_check
    _
  $region3: #{siglip_vision_tower_forward.13} parent=0 // pred_check_branch
    %11 = sbr.rel (0) target = $region5
  $region4: #{siglip_vision_tower_forward.13} parent=0 // pred_region
    _
  $region5: #{siglip_vision_tower_forward.13} parent=0 // pred_fallthru
    _
  // Predicated region
  $region6: #{siglip_vision_tower_forward.13} parent=0 // pred_check
    _
  $region7: #{siglip_vision_tower_forward.13} parent=0 // pred_check_branch
    %13 = sbr.rel (0) target = $region9
  $region8: #{siglip_vision_tower_forward.13} parent=0 // pred_region
    _
  $region9: #{siglip_vision_tower_forward.13} parent=0 // pred_fallthru
    _
  // Predicated region
  $region10: #{siglip_vision_tower_forward.13} parent=0 // pred_check
    _
  $region11: #{siglip_vision_tower_forward.13} parent=0 // pred_check_branch
    %15 = sbr.rel (0) target = $region13
  $region12: #{siglip_vision_tower_forward.13} parent=0 // pred_region
    _
  $region13: #{siglip_vision_tower_forward.13} parent=0 // pred_fallthru
    _
  // Predicated region
  $region14: #{siglip_vision_tower_forward.13} parent=0 // pred_check
    _
  $region15: #{siglip_vision_tower_forward.13} parent=0 // pred_check_branch
    %17 = sbr.rel (0) target = $region17
  $region16: #{siglip_vision_tower_forward.13} parent=0 // pred_region
    _
  $region17: #{siglip_vision_tower_forward.13} parent=0 // pred_fallthru
    _
  // Predicated region
  $region18: #{siglip_vision_tower_forward.13} parent=0 // pred_check
    _
  $region19: #{siglip_vision_tower_forward.13} parent=0 // pred_check_branch
    %19 = sbr.rel (0) target = $region21
  $region20: #{siglip_vision_tower_forward.13} parent=0 // pred_region
    _
  $region21: #{siglip_vision_tower_forward.13} parent=0 // pred_fallthru
    _
  %v21 = vld [vmem:[%s0] sm:$0xf]
  %v22 = vunpack.c.l.bf16 %v21
  %vm23 = vcmask 261120
  %v24 = vsel %vm23, %v22, 0.0
  %25 = vadd.xlane.f32.xlu0 %v24
  %v26 = vpop.xlane.xlu0 %25
  %v27 = vrcp.pop 32.0
  %v28 = vmul.f32 %v26, %v27
  %v29 = vsub.f32 %v22, %v28
  %v30 = vmul.f32 %v29, %v29
  %v31 = vsel %vm23, %v30, 0.0
  %32 = vadd.xlane.f32.xlu0 %v31
  %v33 = vpop.xlane.xlu0 %32
  %v34 = vmul.f32 %v33, %v27
  %v35 = vadd.f32 %v34, 1e-06
  %v36 = vrsqrt.pop %v35
  %v37 = vmul.f32 %v29, %v36
  %v38 = vld [vmem:[%s3] sm:$0x1]
  %v39 = vunpack.c.l.bf16 %v38
  %v40 = vlaneseq
  %v41 = vshrl.u32 %v40, 7
  %v42 = vsub.s32 0, %v41
  %v43 = vrot.slane %v39, %v42
  %v44 = vmul.f32 %v37, %v43
  %v45 = vld [vmem:[%s4] sm:$0x1]
  %v46 = vunpack.c.l.bf16 %v45
  %v47 = vlaneseq
  %v48 = vshrl.u32 %v47, 7
  %v49 = vsub.s32 0, %v48
  %v50 = vrot.slane %v46, %v49
  %v51 = vadd.f32 %v44, %v50
  %v52 = vpack.c.bf16 %v51, %v51
  %v53 = vld [vmem:[%s1] sm:$0xf]
  %v54 = vld [vmem:[%s1 + $0x4] sm:$0xf]
  %v55 = vld [vmem:[%s1 + $0x8] sm:$0xf]
  %v56 = vld [vmem:[%s1 + $0xc] sm:$0xf]
  %v57 = vld [vmem:[%s2] sm:$0x1]
  %v58 = vunpack.c.l.bf16 %v57
  %v59 = vlaneseq
  %v60 = vshrl.u32 %v59, 7
  %v61 = vsub.s32 0, %v60
  %v62 = vrot.slane %v58, %v61
  %v67 = vunpack.c.l.b16 %v53
  %v68 = vunpack.c.l.b16 %v54
  %v69 = vunpack.c.l.b16 %v55
  %v70 = vunpack.c.l.b16 %v56
  %v71 = vpack.c.b16 %v68, %v67
  %v72 = vpack.c.b16 %v70, %v69
  %v76 = vsel %vm23, %v52, 0
  %78 = vmatprep.subr.bf16.mxu0 0
  %79 = vmatpush1.bf16.msra.mxu0 %v71
  %80 = vmatprep.subr.bf16.mxu0 0
  %81 = vmatpush1.bf16.msra.mxu0 %v72
  %82 = vmatprep.subr.bf16.mxu0 0
  %83 = vmatpush1.bf16.msra.mxu0 0
  %84 = vmatprep.subr.bf16.mxu0 0
  %85 = vmatpush1.bf16.msra.mxu0 0
  %86 = vmatprep.subr.bf16.mxu0 0
  %87 = vmatpush1.bf16.msra.mxu0 0
  %88 = vmatprep.subr.bf16.mxu0 0
  %89 = vmatpush1.bf16.msra.mxu0 0
  %90 = vmatprep.subr.bf16.mxu0 0
  %91 = vmatpush1.bf16.msra.mxu0 0
  %92 = vmatprep.subr.bf16.mxu0 0
  %93 = vmatpush1.bf16.msra.mxu0 0
  %94 = vmatprep.subr.bf16.mxu0 0
  %95 = vmatpush1.bf16.msra.mxu0 0
  %96 = vmatprep.subr.bf16.mxu0 0
  %97 = vmatpush1.bf16.msra.mxu0 0
  %98 = vmatprep.subr.bf16.mxu0 0
  %99 = vmatpush1.bf16.msra.mxu0 0
  %100 = vmatprep.subr.bf16.mxu0 0
  %101 = vmatpush1.bf16.msra.mxu0 0
  %102 = vmatprep.subr.bf16.mxu0 0
  %103 = vmatpush1.bf16.msra.mxu0 0
  %104 = vmatprep.subr.bf16.mxu0 0
  %105 = vmatpush1.bf16.msra.mxu0 0
  %106 = vmatprep.subr.bf16.mxu0 0
  %107 = vmatpush1.bf16.msra.mxu0 0
  %108 = vmatprep.subr.bf16.mxu0 0
  %109 = vmatpush1.bf16.msra.mxu0 0
  %110 = vmatprep.mubr.bf16.mxu0 0
  %111 = vmatmul.mubr.bf16.gmra.mrb[0].mxu0 %v76
  %v112 = vpop.f32.mrb[0].mxu0
  %v113 = vadd.f32 %v62, %v112
  %v114 = vpop.f32.mrb[0].mxu0
  %v115 = vpop.f32.mrb[0].mxu0
  %v116 = vpop.f32.mrb[0].mxu0
  %117 = vdwg.mxu0
  %v118 = vpack.c.bf16 %v113, %v113
  %vm119 = vcmask 781312
  %120 = vst.msk [vmem:[%s5] sm:$0xf] %vm119, %v118
  // Predicated region
  $region22: #{siglip_vision_tower_forward.13} parent=0 // pred_check
    _
  $region23: #{siglip_vision_tower_forward.13} parent=0 // pred_check_branch
    %122 = sbr.rel (0) target = $region25
  $region24: #{siglip_vision_tower_forward.13} parent=0 // pred_region
    _
  $region25: #{siglip_vision_tower_forward.13} parent=0 // pred_fallthru
    _
  // Predicated region
  $region26: #{siglip_vision_tower_forward.13} parent=0 // pred_check
    _
  $region27: #{siglip_vision_tower_forward.13} parent=0 // pred_check_branch
    %124 = sbr.rel (0) target = $region29
  $region28: #{siglip_vision_tower_forward.13} parent=0 // pred_region
    _
  $region29: #{siglip_vision_tower_forward.13} parent=0 // pred_fallthru
    _

// kernel: siglip_vision_tower_forward.15
$region0: #{siglip_vision_tower_forward.15}
  #allocation0 [shape = 'u32[]', space=smem, size = 0x4, offset = 0x4, fixed_abs, tag = 'smem constant byte address 0x4 - core index']
  #allocation1 [shape = 'u32[144,128]{1,0:T(1,128)}', space=vmem, size = 0x12000, scoped, tag = 'internal scratch']
  %s0 = inlined_call_operand.vmem [shape: bf16[8,32], index: 0, kind: input, shape index: {}]
  %s1 = inlined_call_operand.vmem [shape: bf16[32,32], index: 1, kind: input, shape index: {}]
  %s2 = inlined_call_operand.vmem [shape: bf16[1,32], index: 2, kind: input, shape index: {}]
  %s3 = inlined_call_operand.vmem [shape: bf16[8,32], index: 3, kind: input, shape index: {}]
  %s4 = inlined_call_operand.vmem [shape: bf16[8,32], index: 4, kind: output, shape index: {}]
  %s5 = sld [smem:[#allocation0]]
  $region26: #{siglip_vision_tower_forward.15} parent=0
    _
  %s7 = ssub.s32 1, %s5
  %s8 = scalar_select 0, %s7, %s5
  // Predicated region
  $region2: #{siglip_vision_tower_forward.15} parent=0 // pred_check
    _
  $region3: #{siglip_vision_tower_forward.15} parent=0 // pred_check_branch
    %10 = sbr.rel (0) target = $region5
  $region4: #{siglip_vision_tower_forward.15} parent=0 // pred_region
    _
  $region5: #{siglip_vision_tower_forward.15} parent=0 // pred_fallthru
    _
  // Predicated region
  $region6: #{siglip_vision_tower_forward.15} parent=0 // pred_check
    _
  $region7: #{siglip_vision_tower_forward.15} parent=0 // pred_check_branch
    %12 = sbr.rel (0) target = $region9
  $region8: #{siglip_vision_tower_forward.15} parent=0 // pred_region
    _
  $region9: #{siglip_vision_tower_forward.15} parent=0 // pred_fallthru
    _
  // Predicated region
  $region10: #{siglip_vision_tower_forward.15} parent=0 // pred_check
    _
  $region11: #{siglip_vision_tower_forward.15} parent=0 // pred_check_branch
    %14 = sbr.rel (0) target = $region13
  $region12: #{siglip_vision_tower_forward.15} parent=0 // pred_region
    _
  $region13: #{siglip_vision_tower_forward.15} parent=0 // pred_fallthru
    _
  // Predicated region
  $region14: #{siglip_vision_tower_forward.15} parent=0 // pred_check
    _
  $region15: #{siglip_vision_tower_forward.15} parent=0 // pred_check_branch
    %16 = sbr.rel (0) target = $region17
  $region16: #{siglip_vision_tower_forward.15} parent=0 // pred_region
    _
  $region17: #{siglip_vision_tower_forward.15} parent=0 // pred_fallthru
    _
  %v18 = vld [vmem:[%s0] sm:$0xf]
  %v19 = vld [vmem:[%s1] sm:$0xf]
  %v20 = vld [vmem:[%s1 + $0x4] sm:$0xf]
  %v21 = vld [vmem:[%s1 + $0x8] sm:$0xf]
  %v22 = vld [vmem:[%s1 + $0xc] sm:$0xf]
  %v23 = vld [vmem:[%s2] sm:$0x1]
  %v24 = vunpack.c.l.bf16 %v23
  %v25 = vlaneseq
  %v26 = vshrl.u32 %v25, 7
  %v27 = vsub.s32 0, %v26
  %v28 = vrot.slane %v24, %v27
  %v33 = vunpack.c.l.b16 %v19
  %v34 = vunpack.c.l.b16 %v20
  %v35 = vunpack.c.l.b16 %v21
  %v36 = vunpack.c.l.b16 %v22
  %v37 = vpack.c.b16 %v34, %v33
  %v38 = vpack.c.b16 %v36, %v35
  %vm41 = vcmask 261120
  %v43 = vsel %vm41, %v18, 0
  %45 = vmatprep.subr.bf16.mxu0 0
  %46 = vmatpush1.bf16.msra.mxu0 %v37
  %47 = vmatprep.subr.bf16.mxu0 0
  %48 = vmatpush1.bf16.msra.mxu0 %v38
  %49 = vmatprep.subr.bf16.mxu0 0
  %50 = vmatpush1.bf16.msra.mxu0 0
  %51 = vmatprep.subr.bf16.mxu0 0
  %52 = vmatpush1.bf16.msra.mxu0 0
  %53 = vmatprep.subr.bf16.mxu0 0
  %54 = vmatpush1.bf16.msra.mxu0 0
  %55 = vmatprep.subr.bf16.mxu0 0
  %56 = vmatpush1.bf16.msra.mxu0 0
  %57 = vmatprep.subr.bf16.mxu0 0
  %58 = vmatpush1.bf16.msra.mxu0 0
  %59 = vmatprep.subr.bf16.mxu0 0
  %60 = vmatpush1.bf16.msra.mxu0 0
  %61 = vmatprep.subr.bf16.mxu0 0
  %62 = vmatpush1.bf16.msra.mxu0 0
  %63 = vmatprep.subr.bf16.mxu0 0
  %64 = vmatpush1.bf16.msra.mxu0 0
  %65 = vmatprep.subr.bf16.mxu0 0
  %66 = vmatpush1.bf16.msra.mxu0 0
  %67 = vmatprep.subr.bf16.mxu0 0
  %68 = vmatpush1.bf16.msra.mxu0 0
  %69 = vmatprep.subr.bf16.mxu0 0
  %70 = vmatpush1.bf16.msra.mxu0 0
  %71 = vmatprep.subr.bf16.mxu0 0
  %72 = vmatpush1.bf16.msra.mxu0 0
  %73 = vmatprep.subr.bf16.mxu0 0
  %74 = vmatpush1.bf16.msra.mxu0 0
  %75 = vmatprep.subr.bf16.mxu0 0
  %76 = vmatpush1.bf16.msra.mxu0 0
  %77 = vmatprep.mubr.bf16.mxu0 0
  %78 = vmatmul.mubr.bf16.gmra.mrb[0].mxu0 %v43
  %v79 = vpop.f32.mrb[0].mxu0
  %v80 = vadd.f32 %v28, %v79
  %v81 = vpop.f32.mrb[0].mxu0
  %v82 = vpop.f32.mrb[0].mxu0
  %v83 = vpop.f32.mrb[0].mxu0
  %84 = vdwg.mxu0
  %v85 = vld [vmem:[%s3] sm:$0xf]
  %v86 = vunpack.c.l.bf16 %v85
  %v87 = vadd.f32 %v80, %v86
  %v88 = vpack.c.bf16 %v87, %v87
  %vm89 = vcmask 257024
  %90 = vst.msk [vmem:[%s4] sm:$0xf] %vm89, %v88
  // Predicated region
  $region18: #{siglip_vision_tower_forward.15} parent=0 // pred_check
    _
  $region19: #{siglip_vision_tower_forward.15} parent=0 // pred_check_branch
    %92 = sbr.rel (0) target = $region21
  $region20: #{siglip_vision_tower_forward.15} parent=0 // pred_region
    _
  $region21: #{siglip_vision_tower_forward.15} parent=0 // pred_fallthru
    _
  // Predicated region
  $region22: #{siglip_vision_tower_forward.15} parent=0 // pred_check
    _
  $region23: #{siglip_vision_tower_forward.15} parent=0 // pred_check_branch
    %94 = sbr.rel (0) target = $region25
  $region24: #{siglip_vision_tower_forward.15} parent=0 // pred_region
    _
  $region25: #{siglip_vision_tower_forward.15} parent=0 // pred_fallthru
    _

// kernel: siglip_vision_tower_forward.12
$region0: #{siglip_vision_tower_forward.12}
  #allocation0 [shape = 'u32[]', space=smem, size = 0x4, offset = 0x4, fixed_abs, tag = 'smem constant byte address 0x4 - core index']
  #allocation1 [shape = 'u32[144,128]{1,0:T(1,128)}', space=vmem, size = 0x12000, scoped, tag = 'internal scratch']
  %s0 = inlined_call_operand.vmem [shape: bf16[2,4,192], index: 0, kind: input, shape index: {}]
  %s1 = inlined_call_operand.vmem [shape: bf16[192,32], index: 1, kind: input, shape index: {}]
  %s2 = inlined_call_operand.vmem [shape: bf16[1,32], index: 2, kind: input, shape index: {}]
  %s3 = inlined_call_operand.vmem [shape: bf16[4,32], index: 3, kind: input, shape index: {}]
  %s4 = inlined_call_operand.vmem [shape: bf16[2,4,32], index: 4, kind: output, shape index: {}]
  %s5 = sld [smem:[#allocation0]]
  $region49: #{siglip_vision_tower_forward.12} parent=0
    _
  %s7 = ssub.s32 1, %s5
  %s8 = scalar_select 0, %s7, %s5
  loop: start=0, step=1, limit=4
  $region2: #{siglip_vision_tower_forward.12} parent=0 // loop_pre_header
    _
  $region3: #{siglip_vision_tower_forward.12} parent=0 // loop_header
    %s10 = sphi 0, %s14
    %p11 = scmp.ge.s32.totalorder %s10, 4
    %s20 = sphi 0, %s22
    %s23 = sphi 0, %s20
    %s24 = sphi 0, %s23
    %s40 = sphi 0, %s24
    %s44 = sphi 0, %s44
    %s46 = sphi 0, %s44
    %s47 = sphi 0, %s46
    %s61 = sphi 0, %s47
    %s65 = sphi 0, %s65
    %s67 = sphi 0, %s65
    %s68 = sphi 0, %s67
    %s82 = sphi 0, %s68
    %s86 = sphi 0, %s86
    %s88 = sphi 0, %s86
    %s89 = sphi 0, %s88
    %s103 = sphi 0, %s89
    %s109 = sphi 0, %s111
    %s112 = sphi 0, %s109
    %s113 = sphi 0, %s112
    %s129 = sphi 0, %s113
  $region4: #{siglip_vision_tower_forward.12} parent=0 // loop_header_branch
    %13 = sbr.rel (%p11) target = $region8
  $region5: #{siglip_vision_tower_forward.12} parent=0 // loop_body
    %s15 = ssub.s32 %s10, 1
    %s16 = ssub.s32 %s10, 2
    %s17 = sadd.s32 %s10, 1
    %s18 = ssub.s32 %s10, %s17
    %p19 = scmp.eq.s32.totalorder %s18, 0
    %s21 = sadd.s32 %s20, 1
    %s22 = scalar_select %p19, %s20, %s21
    %p25 = pneg %p19
    %p26 = scmp.eq.s32.totalorder %s10, 1
    %p27 = por %p25, %p26
    %p28 = scmp.ne.s32.totalorder %s20, %s23
    %p29 = scmp.eq.s32.totalorder %s10, 0
    %p30 = por %p28, %p29
    %p31 = scmp.ne.s32.totalorder %s20, %s23
    %p32 = scmp.eq.s32.totalorder %s15, 1
    %p33 = por %p31, %p32
    %p34 = scmp.ne.s32.totalorder %s23, %s24
    %p35 = scmp.eq.s32.totalorder %s15, 0
    %p36 = por %p34, %p35
    %p37 = scmp.ne.s32.totalorder %s23, %s24
    %p38 = scmp.eq.s32.totalorder %s16, 1
    %p39 = por %p37, %p38
    %p41 = scmp.ne.s32.totalorder %s24, %s40
    %p42 = scmp.eq.s32.totalorder %s16, 0
    %p43 = por %p41, %p42
    %s45 = sadd.s32 %s44, 1
    %p48 = scmp.eq.s32.totalorder %s10, 1
    %p49 = scmp.ne.s32.totalorder %s44, %s46
    %p50 = scmp.eq.s32.totalorder %s10, 0
    %p51 = por %p49, %p50
    %p52 = scmp.ne.s32.totalorder %s44, %s46
    %p53 = scmp.eq.s32.totalorder %s15, 1
    %p54 = por %p52, %p53
    %p55 = scmp.ne.s32.totalorder %s46, %s47
    %p56 = scmp.eq.s32.totalorder %s15, 0
    %p57 = por %p55, %p56
    %p58 = scmp.ne.s32.totalorder %s46, %s47
    %p59 = scmp.eq.s32.totalorder %s16, 1
    %p60 = por %p58, %p59
    %p62 = scmp.ne.s32.totalorder %s47, %s61
    %p63 = scmp.eq.s32.totalorder %s16, 0
    %p64 = por %p62, %p63
    %s66 = sadd.s32 %s65, 1
    %p69 = scmp.eq.s32.totalorder %s10, 1
    %p70 = scmp.ne.s32.totalorder %s65, %s67
    %p71 = scmp.eq.s32.totalorder %s10, 0
    %p72 = por %p70, %p71
    %p73 = scmp.ne.s32.totalorder %s65, %s67
    %p74 = scmp.eq.s32.totalorder %s15, 1
    %p75 = por %p73, %p74
    %p76 = scmp.ne.s32.totalorder %s67, %s68
    %p77 = scmp.eq.s32.totalorder %s15, 0
    %p78 = por %p76, %p77
    %p79 = scmp.ne.s32.totalorder %s67, %s68
    %p80 = scmp.eq.s32.totalorder %s16, 1
    %p81 = por %p79, %p80
    %p83 = scmp.ne.s32.totalorder %s68, %s82
    %p84 = scmp.eq.s32.totalorder %s16, 0
    %p85 = por %p83, %p84
    %s87 = sadd.s32 %s86, 1
    %p90 = scmp.eq.s32.totalorder %s10, 1
    %p91 = scmp.ne.s32.totalorder %s86, %s88
    %p92 = scmp.eq.s32.totalorder %s10, 0
    %p93 = por %p91, %p92
    %p94 = scmp.ne.s32.totalorder %s86, %s88
    %p95 = scmp.eq.s32.totalorder %s15, 1
    %p96 = por %p94, %p95
    %p97 = scmp.ne.s32.totalorder %s88, %s89
    %p98 = scmp.eq.s32.totalorder %s15, 0
    %p99 = por %p97, %p98
    %p100 = scmp.ne.s32.totalorder %s88, %s89
    %p101 = scmp.eq.s32.totalorder %s16, 1
    %p102 = por %p100, %p101
    %p104 = scmp.ne.s32.totalorder %s89, %s103
    %p105 = scmp.eq.s32.totalorder %s16, 0
    %p106 = por %p104, %p105
    %s107 = ssub.s32 %s10, %s17
    %p108 = scmp.eq.s32.totalorder %s107, 0
    %s110 = sadd.s32 %s109, 1
    %s111 = scalar_select %p108, %s109, %s110
    %p114 = pneg %p108
    %p115 = scmp.eq.s32.totalorder %s10, 1
    %p116 = por %p114, %p115
    %p117 = scmp.ne.s32.totalorder %s109, %s112
    %p118 = scmp.eq.s32.totalorder %s10, 0
    %p119 = por %p117, %p118
    %p120 = scmp.ne.s32.totalorder %s109, %s112
    %p121 = scmp.eq.s32.totalorder %s15, 1
    %p122 = por %p120, %p121
    %p123 = scmp.ne.s32.totalorder %s112, %s113
    %p124 = scmp.eq.s32.totalorder %s15, 0
    %p125 = por %p123, %p124
    %p126 = scmp.ne.s32.totalorder %s112, %s113
    %p127 = scmp.eq.s32.totalorder %s16, 1
    %p128 = por %p126, %p127
    %p130 = scmp.ne.s32.totalorder %s113, %s129
    %p131 = scmp.eq.s32.totalorder %s16, 0
    %p132 = por %p130, %p131
    %p133 = scmp.le.s32.totalorder 1, %s10
    %p134 = scmp.lt.s32.totalorder %s10, 3
    %p135 = pnand %p133, %p134
    %p136 = pneg %p135
    // Predicated region
    $region9: #{siglip_vision_tower_forward.12} parent=5 // pred_check
      _
    $region10: #{siglip_vision_tower_forward.12} parent=5 // pred_check_branch
      %138 = sbr.rel (%p135) target = $region12
    $region11: #{siglip_vision_tower_forward.12} parent=5 // pred_region
      %s139 = ssub.s32 %s10, 1
      // Predicated region
      $region13: #{siglip_vision_tower_forward.12} parent=11 // pred_check
        %p140 = pneg %p57
      $region14: #{siglip_vision_tower_forward.12} parent=11 // pred_check_branch
        %142 = sbr.rel (%p140) target = $region16
      $region15: #{siglip_vision_tower_forward.12} parent=11 // pred_region
        _
      $region16: #{siglip_vision_tower_forward.12} parent=11 // pred_fallthru
        _
      // Predicated region
      $region17: #{siglip_vision_tower_forward.12} parent=11 // pred_check
        %p143 = pneg %p78
      $region18: #{siglip_vision_tower_forward.12} parent=11 // pred_check_branch
        %145 = sbr.rel (%p143) target = $region20
      $region19: #{siglip_vision_tower_forward.12} parent=11 // pred_region
        _
      $region20: #{siglip_vision_tower_forward.12} parent=11 // pred_fallthru
        _
      // Predicated region
      $region21: #{siglip_vision_tower_forward.12} parent=11 // pred_check
        %p146 = pneg %p99
      $region22: #{siglip_vision_tower_forward.12} parent=11 // pred_check_branch
        %148 = sbr.rel (%p146) target = $region24
      $region23: #{siglip_vision_tower_forward.12} parent=11 // pred_region
        _
      $region24: #{siglip_vision_tower_forward.12} parent=11 // pred_fallthru
        _
    $region12: #{siglip_vision_tower_forward.12} parent=5 // pred_fallthru
      _
    %p149 = scmp.lt.s32.totalorder %s10, 2
    // Predicated region
    $region25: #{siglip_vision_tower_forward.12} parent=5 // pred_check
      %p150 = pneg %p149
    $region26: #{siglip_vision_tower_forward.12} parent=5 // pred_check_branch
      %152 = sbr.rel (%p150) target = $region28
    $region27: #{siglip_vision_tower_forward.12} parent=5 // pred_region
      // Predicated region
      $region29: #{siglip_vision_tower_forward.12} parent=27 // pred_check
        %p153 = pneg %p30
      $region30: #{siglip_vision_tower_forward.12} parent=27 // pred_check_branch
        %155 = sbr.rel (%p153) target = $region32
      $region31: #{siglip_vision_tower_forward.12} parent=27 // pred_region
        %p156 = scmp.lt.s32.totalorder %s10, 1
        %s157 = scalar_select %p156, %s10, 1
        %s158 = smul.addr %s157, 2
        %s159 = smul.addr %s158, 2
        %s160 = scalar_lea.vmem %s0, %s159
      $region32: #{siglip_vision_tower_forward.12} parent=27 // pred_fallthru
        _
    $region28: #{siglip_vision_tower_forward.12} parent=5 // pred_fallthru
      _
    %p161 = scmp.le.s32.totalorder 1, %s10
    %p162 = scmp.lt.s32.totalorder %s10, 3
    %p163 = pnand %p161, %p162
    %p164 = pneg %p163
    // Predicated region
    $region33: #{siglip_vision_tower_forward.12} parent=5 // pred_check
      _
    $region34: #{siglip_vision_tower_forward.12} parent=5 // pred_check_branch
      %166 = sbr.rel (%p163) target = $region36
    $region35: #{siglip_vision_tower_forward.12} parent=5 // pred_region
      %s167 = ssub.s32 %s10, 1
      %p168 = scmp.lt.s32.totalorder %s15, 1
      %s169 = scalar_select %p168, %s15, 1
      %s170 = smul.addr %s169, 2
      %s171 = smul.addr %s170, 2
      %s172 = scalar_lea.vmem %s0, %s171
      %p173 = pneg %p36
      %p174 = pneg %p33
      %p175 = pneg %p57
      %p176 = pneg %p54
      %p177 = pneg %p78
      %p178 = pneg %p75
      %p179 = pneg %p99
      %p180 = pneg %p96
      %p181 = pneg %p125
      %p182 = pneg %p122
      %p183 = scmp.lt.s32.totalorder %s15, 1
      %s184 = scalar_select %p183, %s15, 1
      %s185 = smul.addr %s184, 2
      %s186 = scalar_lea.vmem %s4, %s185
      %p187 = scmp.lt.s32.totalorder %s15, 1
      %s188 = scalar_select %p187, %s15, 1
      %s189 = smul.addr %s188, 2
      %s190 = smul.addr %s189, 2
      %s191 = scalar_lea.vmem %s0, %s190
      %p192 = scmp.lt.s32.totalorder %s15, 1
      %s193 = scalar_select %p192, %s15, 1
      %s194 = smul.addr %s193, 2
      %s195 = scalar_lea.vmem %s4, %s194
      %v197 = vld [vmem:[%s191] sm:$0xf]
      %v198 = vld [vmem:[%s1] sm:$0xf]
      %v199 = vld [vmem:[%s1 + $0x4] sm:$0xf]
      %v200 = vld [vmem:[%s1 + $0x8] sm:$0xf]
      %v201 = vld [vmem:[%s1 + $0xc] sm:$0xf]
      %v202 = vld [vmem:[%s1 + $0x10] sm:$0xf]
      %v203 = vld [vmem:[%s1 + $0x14] sm:$0xf]
      %v204 = vld [vmem:[%s1 + $0x18] sm:$0xf]
      %v205 = vld [vmem:[%s1 + $0x1c] sm:$0xf]
      %v206 = vld [vmem:[%s1 + $0x20] sm:$0xf]
      %v207 = vld [vmem:[%s1 + $0x24] sm:$0xf]
      %v208 = vld [vmem:[%s1 + $0x28] sm:$0xf]
      %v209 = vld [vmem:[%s1 + $0x2c] sm:$0xf]
      %v210 = vld [vmem:[%s1 + $0x30] sm:$0xf]
      %v211 = vld [vmem:[%s1 + $0x34] sm:$0xf]
      %v212 = vld [vmem:[%s1 + $0x38] sm:$0xf]
      %v213 = vld [vmem:[%s1 + $0x3c] sm:$0xf]
      %v214 = vld [vmem:[%s1 + $0x40] sm:$0xf]
      %v215 = vld [vmem:[%s1 + $0x44] sm:$0xf]
      %v216 = vld [vmem:[%s1 + $0x48] sm:$0xf]
      %v217 = vld [vmem:[%s1 + $0x4c] sm:$0xf]
      %v218 = vld [vmem:[%s1 + $0x50] sm:$0xf]
      %v219 = vld [vmem:[%s1 + $0x54] sm:$0xf]
      %v220 = vld [vmem:[%s1 + $0x58] sm:$0xf]
      %v221 = vld [vmem:[%s1 + $0x5c] sm:$0xf]
      %v222 = vld [vmem:[%s2] sm:$0x1]
      %v223 = vunpack.c.l.bf16 %v222
      %v224 = vlaneseq
      %v225 = vshrl.u32 %v224, 7
      %v226 = vsub.s32 0, %v225
      %v227 = vrot.slane %v223, %v226
      %v230 = vunpack.c.l.s4 1983009808
      %v231 = vunpack.c.0.s8 %v230
      %v232 = vlaneseq
      %v233 = vshrl.u32 %v232, 7
      %v234 = vsub.s32 %v231, %v233
      %v235 = vrot.slane %v197, %v234
      %v236 = vcombine.high %v235, %v235
      %v262 = vunpack.c.l.b16 %v198
      %v263 = vunpack.c.l.b16 %v199
      %v264 = vunpack.c.l.b16 %v200
      %v265 = vunpack.c.l.b16 %v201
      %v266 = vunpack.c.l.b16 %v202
      %v267 = vunpack.c.l.b16 %v203
      %v268 = vunpack.c.l.b16 %v204
      %v269 = vunpack.c.l.b16 %v205
      %v270 = vunpack.c.l.b16 %v206
      %v271 = vunpack.c.l.b16 %v207
      %v272 = vunpack.c.l.b16 %v208
      %v273 = vunpack.c.l.b16 %v209
      %v274 = vunpack.c.l.b16 %v210
      %v275 = vunpack.c.l.b16 %v211
      %v276 = vunpack.c.l.b16 %v212
      %v277 = vunpack.c.l.b16 %v213
      %v278 = vunpack.c.l.b16 %v214
      %v279 = vunpack.c.l.b16 %v215
      %v280 = vunpack.c.l.b16 %v216
      %v281 = vunpack.c.l.b16 %v217
      %v282 = vunpack.c.l.b16 %v218
      %v283 = vunpack.c.l.b16 %v219
      %v284 = vunpack.c.l.b16 %v220
      %v285 = vunpack.c.l.b16 %v221
      %v286 = vpack.c.b16 %v263, %v262
      %v287 = vpack.c.b16 %v265, %v264
      %v288 = vpack.c.b16 %v267, %v266
      %v289 = vpack.c.b16 %v269, %v268
      %v290 = vpack.c.b16 %v271, %v270
      %v291 = vpack.c.b16 %v273, %v272
      %v292 = vpack.c.b16 %v275, %v274
      %v293 = vpack.c.b16 %v277, %v276
      %v294 = vpack.c.b16 %v279, %v278
      %v295 = vpack.c.b16 %v281, %v280
      %v296 = vpack.c.b16 %v283, %v282
      %v297 = vpack.c.b16 %v285, %v284
      %vm310 = vcmask 523264
      %v312 = vsel %vm310, %v236, 0
      %314 = vmatprep.subr.bf16.mxu0 0
      %315 = vmatpush1.bf16.msra.mxu0 %v286
      %316 = vmatprep.subr.bf16.mxu0 0
      %317 = vmatpush1.bf16.msra.mxu0 %v287
      %318 = vmatprep.subr.bf16.mxu0 0
      %319 = vmatpush1.bf16.msra.mxu0 %v288
      %320 = vmatprep.subr.bf16.mxu0 0
      %321 = vmatpush1.bf16.msra.mxu0 %v289
      %322 = vmatprep.subr.bf16.mxu0 0
      %323 = vmatpush1.bf16.msra.mxu0 %v290
      %324 = vmatprep.subr.bf16.mxu0 0
      %325 = vmatpush1.bf16.msra.mxu0 %v291
      %326 = vmatprep.subr.bf16.mxu0 0
      %327 = vmatpush1.bf16.msra.mxu0 %v292
      %328 = vmatprep.subr.bf16.mxu0 0
      %329 = vmatpush1.bf16.msra.mxu0 %v293
      %330 = vmatprep.subr.bf16.mxu0 0
      %331 = vmatpush1.bf16.msra.mxu0 %v294
      %332 = vmatprep.subr.bf16.mxu0 0
      %333 = vmatpush1.bf16.msra.mxu0 %v295
      %334 = vmatprep.subr.bf16.mxu0 0
      %335 = vmatpush1.bf16.msra.mxu0 %v296
      %336 = vmatprep.subr.bf16.mxu0 0
      %337 = vmatpush1.bf16.msra.mxu0 %v297
      %338 = vmatprep.subr.bf16.mxu0 0
      %339 = vmatpush1.bf16.msra.mxu0 0
      %340 = vmatprep.subr.bf16.mxu0 0
      %341 = vmatpush1.bf16.msra.mxu0 0
      %342 = vmatprep.subr.bf16.mxu0 0
      %343 = vmatpush1.bf16.msra.mxu0 0
      %344 = vmatprep.subr.bf16.mxu0 0
      %345 = vmatpush1.bf16.msra.mxu0 0
      %346 = vmatprep.mubr.bf16.mxu0 %v312
      %347 = vmatmul.mubr.bf16.gmra.mrb[0].mxu0 %v235
      %v348 = vpop.f32.mrb[0].mxu0
      %v349 = vadd.f32 %v227, %v348
      %v350 = vpop.f32.mrb[0].mxu0
      %v351 = vpop.f32.mrb[0].mxu0
      %v352 = vpop.f32.mrb[0].mxu0
      %353 = vdwg.mxu0
      %v354 = vld [vmem:[%s3] sm:$0x3]
      %v355 = vunpack.c.l.bf16 %v354
      %v356 = vadd.f32 %v349, %v355
      %v357 = vpack.c.bf16 %v356, %v356
      %vm358 = vcmask 254976
      %359 = vst.msk [vmem:[%s195] sm:$0x3] %vm358, %v357
      %p360 = scmp.lt.s32.totalorder %s15, 1
      %s361 = scalar_select %p360, %s15, 1
      %s362 = smul.addr %s361, 2
      %s363 = scalar_lea.vmem %s4, %s362
      // Predicated region
      $region37: #{siglip_vision_tower_forward.12} parent=35 // pred_check
        %p364 = pneg %p122
      $region38: #{siglip_vision_tower_forward.12} parent=35 // pred_check_branch
        %366 = sbr.rel (%p364) target = $region40
      $region39: #{siglip_vision_tower_forward.12} parent=35 // pred_region
        _
      $region40: #{siglip_vision_tower_forward.12} parent=35 // pred_fallthru
        _
    $region36: #{siglip_vision_tower_forward.12} parent=5 // pred_fallthru
      _
    %p367 = scmp.le.s32.totalorder 2, %s10
    // Predicated region
    $region41: #{siglip_vision_tower_forward.12} parent=5 // pred_check
      %p368 = pneg %p367
    $region42: #{siglip_vision_tower_forward.12} parent=5 // pred_check_branch
      %370 = sbr.rel (%p368) target = $region44
    $region43: #{siglip_vision_tower_forward.12} parent=5 // pred_region
      %s371 = ssub.s32 %s10, 2
      // Predicated region
      $region45: #{siglip_vision_tower_forward.12} parent=43 // pred_check
        %p372 = pneg %p128
      $region46: #{siglip_vision_tower_forward.12} parent=43 // pred_check_branch
        %374 = sbr.rel (%p372) target = $region48
      $region47: #{siglip_vision_tower_forward.12} parent=43 // pred_region
        %p375 = scmp.lt.s32.totalorder %s16, 1
        %s376 = scalar_select %p375, %s16, 1
        %s377 = smul.addr %s376, 2
        %s378 = scalar_lea.vmem %s4, %s377
      $region48: #{siglip_vision_tower_forward.12} parent=43 // pred_fallthru
        _
    $region44: #{siglip_vision_tower_forward.12} parent=5 // pred_fallthru
      _
  $region6: #{siglip_vision_tower_forward.12} parent=0 // loop_footer
    %s14 = sadd.s32 1, %s10
  $region7: #{siglip_vision_tower_forward.12} parent=0 // loop_footer_branch
    %9 = sbr.rel target = $region3
  $region8: #{siglip_vision_tower_forward.12} parent=0 // loop_exit
    _

// kernel: siglip_vision_tower_forward.14
$region0: #{siglip_vision_tower_forward.14}
  #allocation0 [shape = 'u32[]', space=smem, size = 0x4, offset = 0x4, fixed_abs, tag = 'smem constant byte address 0x4 - core index']
  #allocation1 [shape = 'u32[144,128]{1,0:T(1,128)}', space=vmem, size = 0x12000, scoped, tag = 'internal scratch']
  %s0 = inlined_call_operand.vmem [shape: bf16[2,4,96], index: 0, kind: input, shape index: {}]
  %s1 = inlined_call_operand.vmem [shape: bf16[2,4,32], index: 1, kind: output, shape index: {}]
  %s2 = sld [smem:[#allocation0]]
  $region37: #{siglip_vision_tower_forward.14} parent=0
    _
  %s4 = ssub.s32 1, %s2
  %s5 = scalar_select 0, %s4, %s2
  loop: start=0, step=1, limit=4
  $region2: #{siglip_vision_tower_forward.14} parent=0 // loop_pre_header
    _
  $region3: #{siglip_vision_tower_forward.14} parent=0 // loop_header
    %s7 = sphi 0, %s11
    %p8 = scmp.ge.s32.totalorder %s7, 4
    %s17 = sphi 0, %s19
    %s20 = sphi 0, %s17
    %s21 = sphi 0, %s20
    %s37 = sphi 0, %s21
    %s43 = sphi 0, %s45
    %s46 = sphi 0, %s43
    %s47 = sphi 0, %s46
    %s63 = sphi 0, %s47
  $region4: #{siglip_vision_tower_forward.14} parent=0 // loop_header_branch
    %10 = sbr.rel (%p8) target = $region8
  $region5: #{siglip_vision_tower_forward.14} parent=0 // loop_body
    %s12 = ssub.s32 %s7, 1
    %s13 = ssub.s32 %s7, 2
    %s14 = sadd.s32 %s7, 1
    %s15 = ssub.s32 %s7, %s14
    %p16 = scmp.eq.s32.totalorder %s15, 0
    %s18 = sadd.s32 %s17, 1
    %s19 = scalar_select %p16, %s17, %s18
    %p22 = pneg %p16
    %p23 = scmp.eq.s32.totalorder %s7, 1
    %p24 = por %p22, %p23
    %p25 = scmp.ne.s32.totalorder %s17, %s20
    %p26 = scmp.eq.s32.totalorder %s7, 0
    %p27 = por %p25, %p26
    %p28 = scmp.ne.s32.totalorder %s17, %s20
    %p29 = scmp.eq.s32.totalorder %s12, 1
    %p30 = por %p28, %p29
    %p31 = scmp.ne.s32.totalorder %s20, %s21
    %p32 = scmp.eq.s32.totalorder %s12, 0
    %p33 = por %p31, %p32
    %p34 = scmp.ne.s32.totalorder %s20, %s21
    %p35 = scmp.eq.s32.totalorder %s13, 1
    %p36 = por %p34, %p35
    %p38 = scmp.ne.s32.totalorder %s21, %s37
    %p39 = scmp.eq.s32.totalorder %s13, 0
    %p40 = por %p38, %p39
    %s41 = ssub.s32 %s7, %s14
    %p42 = scmp.eq.s32.totalorder %s41, 0
    %s44 = sadd.s32 %s43, 1
    %s45 = scalar_select %p42, %s43, %s44
    %p48 = pneg %p42
    %p49 = scmp.eq.s32.totalorder %s7, 1
    %p50 = por %p48, %p49
    %p51 = scmp.ne.s32.totalorder %s43, %s46
    %p52 = scmp.eq.s32.totalorder %s7, 0
    %p53 = por %p51, %p52
    %p54 = scmp.ne.s32.totalorder %s43, %s46
    %p55 = scmp.eq.s32.totalorder %s12, 1
    %p56 = por %p54, %p55
    %p57 = scmp.ne.s32.totalorder %s46, %s47
    %p58 = scmp.eq.s32.totalorder %s12, 0
    %p59 = por %p57, %p58
    %p60 = scmp.ne.s32.totalorder %s46, %s47
    %p61 = scmp.eq.s32.totalorder %s13, 1
    %p62 = por %p60, %p61
    %p64 = scmp.ne.s32.totalorder %s47, %s63
    %p65 = scmp.eq.s32.totalorder %s13, 0
    %p66 = por %p64, %p65
    %p67 = scmp.le.s32.totalorder 1, %s7
    %p68 = scmp.lt.s32.totalorder %s7, 3
    %p69 = pnand %p67, %p68
    %p70 = pneg %p69
    // Predicated region
    $region9: #{siglip_vision_tower_forward.14} parent=5 // pred_check
      _
    $region10: #{siglip_vision_tower_forward.14} parent=5 // pred_check_branch
      %72 = sbr.rel (%p69) target = $region12
    $region11: #{siglip_vision_tower_forward.14} parent=5 // pred_region
      %s73 = ssub.s32 %s7, 1
    $region12: #{siglip_vision_tower_forward.14} parent=5 // pred_fallthru
      _
    %p74 = scmp.lt.s32.totalorder %s7, 2
    // Predicated region
    $region13: #{siglip_vision_tower_forward.14} parent=5 // pred_check
      %p75 = pneg %p74
    $region14: #{siglip_vision_tower_forward.14} parent=5 // pred_check_branch
      %77 = sbr.rel (%p75) target = $region16
    $region15: #{siglip_vision_tower_forward.14} parent=5 // pred_region
      // Predicated region
      $region17: #{siglip_vision_tower_forward.14} parent=15 // pred_check
        %p78 = pneg %p27
      $region18: #{siglip_vision_tower_forward.14} parent=15 // pred_check_branch
        %80 = sbr.rel (%p78) target = $region20
      $region19: #{siglip_vision_tower_forward.14} parent=15 // pred_region
        %p81 = scmp.lt.s32.totalorder %s7, 1
        %s82 = scalar_select %p81, %s7, 1
        %s83 = smul.addr %s82, 2
        %s84 = scalar_lea.vmem %s0, %s83
      $region20: #{siglip_vision_tower_forward.14} parent=15 // pred_fallthru
        _
    $region16: #{siglip_vision_tower_forward.14} parent=5 // pred_fallthru
      _
    %p85 = scmp.le.s32.totalorder 1, %s7
    %p86 = scmp.lt.s32.totalorder %s7, 3
    %p87 = pnand %p85, %p86
    %p88 = pneg %p87
    // Predicated region
    $region21: #{siglip_vision_tower_forward.14} parent=5 // pred_check
      _
    $region22: #{siglip_vision_tower_forward.14} parent=5 // pred_check_branch
      %90 = sbr.rel (%p87) target = $region24
    $region23: #{siglip_vision_tower_forward.14} parent=5 // pred_region
      %s91 = ssub.s32 %s7, 1
      %p92 = scmp.lt.s32.totalorder %s12, 1
      %s93 = scalar_select %p92, %s12, 1
      %s94 = smul.addr %s93, 2
      %s95 = scalar_lea.vmem %s0, %s94
      %p96 = pneg %p33
      %p97 = pneg %p30
      %p98 = pneg %p59
      %p99 = pneg %p56
      %p100 = scmp.lt.s32.totalorder %s12, 1
      %s101 = scalar_select %p100, %s12, 1
      %s102 = smul.addr %s101, 2
      %s103 = scalar_lea.vmem %s1, %s102
      %p104 = scmp.lt.s32.totalorder %s12, 1
      %s105 = scalar_select %p104, %s12, 1
      %s106 = smul.addr %s105, 2
      %s107 = scalar_lea.vmem %s0, %s106
      %p108 = scmp.lt.s32.totalorder %s12, 1
      %s109 = scalar_select %p108, %s12, 1
      %s110 = smul.addr %s109, 2
      %s111 = scalar_lea.vmem %s1, %s110
      %v113 = vld [vmem:[%s107] sm:$0x3]
      %v116 = vunpack.c.l.s4 1983009808
      %v117 = vunpack.c.0.s8 %v116
      %v118 = vlaneseq
      %v119 = vshrl.u32 %v118, 7
      %v120 = vsub.s32 %v117, %v119
      %v121 = vrot.slane %v113, %v120
      %122 = vrot.lane.b32.xlu0 %v121, 96
      %v123 = vpop.permute.xlu0 %122
      %vm124 = vcmask 64512
      %v126 = vsel %vm124, %v113, 0
      %v129 = vsel %vm124, %v123, 0
      %131 = vmatprep.subr.bf16.mxu0 0
      %132 = vmatpush1.bf16.xpose.msra.mxu0 %v129
      %133 = vmatprep.subr.bf16.mxu0 0
      %134 = vmatpush1.bf16.xpose.msra.mxu0 0
      %135 = vmatprep.subr.bf16.mxu0 0
      %136 = vmatpush1.bf16.xpose.msra.mxu0 0
      %137 = vmatprep.subr.bf16.mxu0 0
      %138 = vmatpush1.bf16.xpose.msra.mxu0 0
      %139 = vmatprep.subr.bf16.mxu0 0
      %140 = vmatpush1.bf16.xpose.msra.mxu0 0
      %141 = vmatprep.subr.bf16.mxu0 0
      %142 = vmatpush1.bf16.xpose.msra.mxu0 0
      %143 = vmatprep.subr.bf16.mxu0 0
      %144 = vmatpush1.bf16.xpose.msra.mxu0 0
      %145 = vmatprep.subr.bf16.mxu0 0
      %146 = vmatpush1.bf16.xpose.msra.mxu0 0
      %147 = vmatprep.subr.bf16.mxu0 0
      %148 = vmatpush1.bf16.xpose.msra.mxu0 0
      %149 = vmatprep.subr.bf16.mxu0 0
      %150 = vmatpush1.bf16.xpose.msra.mxu0 0
      %151 = vmatprep.subr.bf16.mxu0 0
      %152 = vmatpush1.bf16.xpose.msra.mxu0 0
      %153 = vmatprep.subr.bf16.mxu0 0
      %154 = vmatpush1.bf16.xpose.msra.mxu0 0
      %155 = vmatprep.subr.bf16.mxu0 0
      %156 = vmatpush1.bf16.xpose.msra.mxu0 0
      %157 = vmatprep.subr.bf16.mxu0 0
      %158 = vmatpush1.bf16.xpose.msra.mxu0 0
      %159 = vmatprep.subr.bf16.mxu0 0
      %160 = vmatpush1.bf16.xpose.msra.mxu0 0
      %161 = vmatprep.subr.bf16.mxu0 0
      %162 = vmatpush1.bf16.xpose.msra.mxu0 0
      %163 = vmatprep.mubr.bf16.mxu0 0
      %164 = vmatmul.mubr.bf16.gmra.mrb[0].mxu0 %v126
      %v165 = vpop.f32.mrb[0].mxu0
      %v166 = vadd.f32 0.0, %v165
      %v167 = vpop.f32.mrb[0].mxu0
      %v168 = vpop.f32.mrb[0].mxu0
      %v169 = vpop.f32.mrb[0].mxu0
      %170 = vdwg.mxu0
      %v171 = vmul.f32 %v166, 0.35355338
      %vm172 = vcmask 27648
      %v173 = vsel %vm172, %v171, -inf
      %174 = vmax.xlane.f32.xlu0 %v173
      %v175 = vpop.xlane.xlu0 %174
      %v176 = vsub.f32 %v171, %v175
      %v177 = vmul.f32 %v176, 1.442695
      %v178 = vpow.pop %v177
      %v179 = vsel %vm172, %v178, 0.0
      %180 = vadd.xlane.f32.xlu0 %v179
      %v181 = vpop.xlane.xlu0 %180
      %v182 = vpack.c.bf16 %v178, %v178
      %183 = vrot.lane.b32.xlu0 %v121, 64
      %v184 = vpop.permute.xlu0 %183
      %vm185 = vcmask 31744
      %v187 = vsel %vm185, %v182, 0
      %vm189 = vcmask 1041408
      %v191 = vsel %vm189, %v184, 0
      %193 = vmatprep.subr.bf16.mxu0 0
      %194 = vmatpush1.bf16.msra.mxu0 %v191
      %195 = vmatprep.subr.bf16.mxu0 0
      %196 = vmatpush1.bf16.msra.mxu0 0
      %197 = vmatprep.subr.bf16.mxu0 0
      %198 = vmatpush1.bf16.msra.mxu0 0
      %199 = vmatprep.subr.bf16.mxu0 0
      %200 = vmatpush1.bf16.msra.mxu0 0
      %201 = vmatprep.subr.bf16.mxu0 0
      %202 = vmatpush1.bf16.msra.mxu0 0
      %203 = vmatprep.subr.bf16.mxu0 0
      %204 = vmatpush1.bf16.msra.mxu0 0
      %205 = vmatprep.subr.bf16.mxu0 0
      %206 = vmatpush1.bf16.msra.mxu0 0
      %207 = vmatprep.subr.bf16.mxu0 0
      %208 = vmatpush1.bf16.msra.mxu0 0
      %209 = vmatprep.subr.bf16.mxu0 0
      %210 = vmatpush1.bf16.msra.mxu0 0
      %211 = vmatprep.subr.bf16.mxu0 0
      %212 = vmatpush1.bf16.msra.mxu0 0
      %213 = vmatprep.subr.bf16.mxu0 0
      %214 = vmatpush1.bf16.msra.mxu0 0
      %215 = vmatprep.subr.bf16.mxu0 0
      %216 = vmatpush1.bf16.msra.mxu0 0
      %217 = vmatprep.subr.bf16.mxu0 0
      %218 = vmatpush1.bf16.msra.mxu0 0
      %219 = vmatprep.subr.bf16.mxu0 0
      %220 = vmatpush1.bf16.msra.mxu0 0
      %221 = vmatprep.subr.bf16.mxu0 0
      %222 = vmatpush1.bf16.msra.mxu0 0
      %223 = vmatprep.subr.bf16.mxu0 0
      %224 = vmatpush1.bf16.msra.mxu0 0
      %225 = vmatprep.mubr.bf16.mxu0 0
      %226 = vmatmul.mubr.bf16.gmra.mrb[0].mxu0 %v187
      %v227 = vpop.f32.mrb[0].mxu0
      %v228 = vadd.f32 0.0, %v227
      %v229 = vpop.f32.mrb[0].mxu0
      %v230 = vpop.f32.mrb[0].mxu0
      %v231 = vpop.f32.mrb[0].mxu0
      %232 = vdwg.mxu0
      %v233 = vrcp.pop %v181
      %v234 = vmul.f32 %v228, %v233
      %v235 = vpack.c.bf16 %v234, %v234
      %vm236 = vcmask 58368
      %237 = vst.msk [vmem:[%s111] sm:$0x3] %vm236, %v235
      %v238 = vld [vmem:[%s107] sm:$0x3]
      %v241 = vunpack.c.l.s4 1983009808
      %v242 = vunpack.c.0.s8 %v241
      %v243 = vlaneseq
      %v244 = vshrl.u32 %v243, 7
      %v245 = vsub.s32 %v242, %v244
      %v246 = vrot.slane %v238, %v245
      %247 = vrot.lane.b32.xlu0 %v246, 120
      %v248 = vpop.permute.xlu0 %247
      %249 = vrot.lane.b32.xlu0 %v246, 88
      %v250 = vpop.permute.xlu0 %249
      %v252 = vsel %vm124, %v248, 0
      %v255 = vsel %vm124, %v250, 0
      %257 = vmatprep.subr.bf16.mxu0 0
      %258 = vmatpush1.bf16.xpose.msra.mxu0 %v255
      %259 = vmatprep.subr.bf16.mxu0 0
      %260 = vmatpush1.bf16.xpose.msra.mxu0 0
      %261 = vmatprep.subr.bf16.mxu0 0
      %262 = vmatpush1.bf16.xpose.msra.mxu0 0
      %263 = vmatprep.subr.bf16.mxu0 0
      %264 = vmatpush1.bf16.xpose.msra.mxu0 0
      %265 = vmatprep.subr.bf16.mxu0 0
      %266 = vmatpush1.bf16.xpose.msra.mxu0 0
      %267 = vmatprep.subr.bf16.mxu0 0
      %268 = vmatpush1.bf16.xpose.msra.mxu0 0
      %269 = vmatprep.subr.bf16.mxu0 0
      %270 = vmatpush1.bf16.xpose.msra.mxu0 0
      %271 = vmatprep.subr.bf16.mxu0 0
      %272 = vmatpush1.bf16.xpose.msra.mxu0 0
      %273 = vmatprep.subr.bf16.mxu0 0
      %274 = vmatpush1.bf16.xpose.msra.mxu0 0
      %275 = vmatprep.subr.bf16.mxu0 0
      %276 = vmatpush1.bf16.xpose.msra.mxu0 0
      %277 = vmatprep.subr.bf16.mxu0 0
      %278 = vmatpush1.bf16.xpose.msra.mxu0 0
      %279 = vmatprep.subr.bf16.mxu0 0
      %280 = vmatpush1.bf16.xpose.msra.mxu0 0
      %281 = vmatprep.subr.bf16.mxu0 0
      %282 = vmatpush1.bf16.xpose.msra.mxu0 0
      %283 = vmatprep.subr.bf16.mxu0 0
      %284 = vmatpush1.bf16.xpose.msra.mxu0 0
      %285 = vmatprep.subr.bf16.mxu0 0
      %286 = vmatpush1.bf16.xpose.msra.mxu0 0
      %287 = vmatprep.subr.bf16.mxu0 0
      %288 = vmatpush1.bf16.xpose.msra.mxu0 0
      %289 = vmatprep.mubr.bf16.mxu0 0
      %290 = vmatmul.mubr.bf16.gmra.mrb[0].mxu0 %v252
      %v291 = vpop.f32.mrb[0].mxu0
      %v292 = vadd.f32 0.0, %v291
      %v293 = vpop.f32.mrb[0].mxu0
      %v294 = vpop.f32.mrb[0].mxu0
      %v295 = vpop.f32.mrb[0].mxu0
      %296 = vdwg.mxu0
      %v297 = vmul.f32 %v292, 0.35355338
      %v298 = vsel %vm172, %v297, -inf
      %299 = vmax.xlane.f32.xlu0 %v298
      %v300 = vpop.xlane.xlu0 %299
      %v301 = vsub.f32 %v297, %v300
      %v302 = vmul.f32 %v301, 1.442695
      %v303 = vpow.pop %v302
      %v304 = vsel %vm172, %v303, 0.0
      %305 = vadd.xlane.f32.xlu0 %v304
      %v306 = vpop.xlane.xlu0 %305
      %v307 = vpack.c.bf16 %v303, %v303
      %308 = vrot.lane.b32.xlu0 %v246, 56
      %v309 = vpop.permute.xlu0 %308
      %v311 = vsel %vm185, %v307, 0
      %v314 = vsel %vm189, %v309, 0
      %316 = vmatprep.subr.bf16.mxu0 0
      %317 = vmatpush1.bf16.msra.mxu0 %v314
      %318 = vmatprep.subr.bf16.mxu0 0
      %319 = vmatpush1.bf16.msra.mxu0 0
      %320 = vmatprep.subr.bf16.mxu0 0
      %321 = vmatpush1.bf16.msra.mxu0 0
      %322 = vmatprep.subr.bf16.mxu0 0
      %323 = vmatpush1.bf16.msra.mxu0 0
      %324 = vmatprep.subr.bf16.mxu0 0
      %325 = vmatpush1.bf16.msra.mxu0 0
      %326 = vmatprep.subr.bf16.mxu0 0
      %327 = vmatpush1.bf16.msra.mxu0 0
      %328 = vmatprep.subr.bf16.mxu0 0
      %329 = vmatpush1.bf16.msra.mxu0 0
      %330 = vmatprep.subr.bf16.mxu0 0
      %331 = vmatpush1.bf16.msra.mxu0 0
      %332 = vmatprep.subr.bf16.mxu0 0
      %333 = vmatpush1.bf16.msra.mxu0 0
      %334 = vmatprep.subr.bf16.mxu0 0
      %335 = vmatpush1.bf16.msra.mxu0 0
      %336 = vmatprep.subr.bf16.mxu0 0
      %337 = vmatpush1.bf16.msra.mxu0 0
      %338 = vmatprep.subr.bf16.mxu0 0
      %339 = vmatpush1.bf16.msra.mxu0 0
      %340 = vmatprep.subr.bf16.mxu0 0
      %341 = vmatpush1.bf16.msra.mxu0 0
      %342 = vmatprep.subr.bf16.mxu0 0
      %343 = vmatpush1.bf16.msra.mxu0 0
      %344 = vmatprep.subr.bf16.mxu0 0
      %345 = vmatpush1.bf16.msra.mxu0 0
      %346 = vmatprep.subr.bf16.mxu0 0
      %347 = vmatpush1.bf16.msra.mxu0 0
      %348 = vmatprep.mubr.bf16.mxu0 0
      %349 = vmatmul.mubr.bf16.gmra.mrb[0].mxu0 %v311
      %v350 = vpop.f32.mrb[0].mxu0
      %v351 = vadd.f32 0.0, %v350
      %v352 = vpop.f32.mrb[0].mxu0
      %v353 = vpop.f32.mrb[0].mxu0
      %v354 = vpop.f32.mrb[0].mxu0
      %355 = vdwg.mxu0
      %v356 = vrcp.pop %v306
      %v357 = vmul.f32 %v351, %v356
      %v358 = vpack.c.bf16 %v357, %v357
      %v361 = vunpack.c.l.s4 1983009808
      %v362 = vunpack.c.0.s8 %v361
      %v363 = vlaneseq
      %v364 = vshrl.u32 %v363, 7
      %v365 = vsub.s32 %v362, %v364
      %v366 = vrot.slane %v358, %v365
      %367 = vrot.lane.b32.xlu0 %v366, 8
      %v368 = vpop.permute.xlu0 %367
      %vm370 = vcmask 123968
      %371 = vst.msk [vmem:[%s111] sm:$0x3] %vm370, %v368
      %v372 = vld [vmem:[%s107] sm:$0x3]
      %v375 = vunpack.c.l.s4 1983009808
      %v376 = vunpack.c.0.s8 %v375
      %v377 = vlaneseq
      %v378 = vshrl.u32 %v377, 7
      %v379 = vsub.s32 %v376, %v378
      %v380 = vrot.slane %v372, %v379
      %381 = vrot.lane.b32.xlu0 %v380, 112
      %v382 = vpop.permute.xlu0 %381
      %383 = vrot.lane.b32.xlu0 %v380, 80
      %v384 = vpop.permute.xlu0 %383
      %v386 = vsel %vm124, %v382, 0
      %v389 = vsel %vm124, %v384, 0
      %391 = vmatprep.subr.bf16.mxu0 0
      %392 = vmatpush1.bf16.xpose.msra.mxu0 %v389
      %393 = vmatprep.subr.bf16.mxu0 0
      %394 = vmatpush1.bf16.xpose.msra.mxu0 0
      %395 = vmatprep.subr.bf16.mxu0 0
      %396 = vmatpush1.bf16.xpose.msra.mxu0 0
      %397 = vmatprep.subr.bf16.mxu0 0
      %398 = vmatpush1.bf16.xpose.msra.mxu0 0
      %399 = vmatprep.subr.bf16.mxu0 0
      %400 = vmatpush1.bf16.xpose.msra.mxu0 0
      %401 = vmatprep.subr.bf16.mxu0 0
      %402 = vmatpush1.bf16.xpose.msra.mxu0 0
      %403 = vmatprep.subr.bf16.mxu0 0
      %404 = vmatpush1.bf16.xpose.msra.mxu0 0
      %405 = vmatprep.subr.bf16.mxu0 0
      %406 = vmatpush1.bf16.xpose.msra.mxu0 0
      %407 = vmatprep.subr.bf16.mxu0 0
      %408 = vmatpush1.bf16.xpose.msra.mxu0 0
      %409 = vmatprep.subr.bf16.mxu0 0
      %410 = vmatpush1.bf16.xpose.msra.mxu0 0
      %411 = vmatprep.subr.bf16.mxu0 0
      %412 = vmatpush1.bf16.xpose.msra.mxu0 0
      %413 = vmatprep.subr.bf16.mxu0 0
      %414 = vmatpush1.bf16.xpose.msra.mxu0 0
      %415 = vmatprep.subr.bf16.mxu0 0
      %416 = vmatpush1.bf16.xpose.msra.mxu0 0
      %417 = vmatprep.subr.bf16.mxu0 0
      %418 = vmatpush1.bf16.xpose.msra.mxu0 0
      %419 = vmatprep.subr.bf16.mxu0 0
      %420 = vmatpush1.bf16.xpose.msra.mxu0 0
      %421 = vmatprep.subr.bf16.mxu0 0
      %422 = vmatpush1.bf16.xpose.msra.mxu0 0
      %423 = vmatprep.mubr.bf16.mxu0 0
      %424 = vmatmul.mubr.bf16.gmra.mrb[0].mxu0 %v386
      %v425 = vpop.f32.mrb[0].mxu0
      %v426 = vadd.f32 0.0, %v425
      %v427 = vpop.f32.mrb[0].mxu0
      %v428 = vpop.f32.mrb[0].mxu0
      %v429 = vpop.f32.mrb[0].mxu0
      %430 = vdwg.mxu0
      %v431 = vmul.f32 %v426, 0.35355338
      %v432 = vsel %vm172, %v431, -inf
      %433 = vmax.xlane.f32.xlu0 %v432
      %v434 = vpop.xlane.xlu0 %433
      %v435 = vsub.f32 %v431, %v434
      %v436 = vmul.f32 %v435, 1.442695
      %v437 = vpow.pop %v436
      %v438 = vsel %vm172, %v437, 0.0
      %439 = vadd.xlane.f32.xlu0 %v438
      %v440 = vpop.xlane.xlu0 %439
      %v441 = vpack.c.bf16 %v437, %v437
      %442 = vrot.lane.b32.xlu0 %v380, 48
      %v443 = vpop.permute.xlu0 %442
      %v445 = vsel %vm185, %v441, 0
      %v448 = vsel %vm189, %v443, 0
      %450 = vmatprep.subr.bf16.mxu0 0
      %451 = vmatpush1.bf16.msra.mxu0 %v448
      %452 = vmatprep.subr.bf16.mxu0 0
      %453 = vmatpush1.bf16.msra.mxu0 0
      %454 = vmatprep.subr.bf16.mxu0 0
      %455 = vmatpush1.bf16.msra.mxu0 0
      %456 = vmatprep.subr.bf16.mxu0 0
      %457 = vmatpush1.bf16.msra.mxu0 0
      %458 = vmatprep.subr.bf16.mxu0 0
      %459 = vmatpush1.bf16.msra.mxu0 0
      %460 = vmatprep.subr.bf16.mxu0 0
      %461 = vmatpush1.bf16.msra.mxu0 0
      %462 = vmatprep.subr.bf16.mxu0 0
      %463 = vmatpush1.bf16.msra.mxu0 0
      %464 = vmatprep.subr.bf16.mxu0 0
      %465 = vmatpush1.bf16.msra.mxu0 0
      %466 = vmatprep.subr.bf16.mxu0 0
      %467 = vmatpush1.bf16.msra.mxu0 0
      %468 = vmatprep.subr.bf16.mxu0 0
      %469 = vmatpush1.bf16.msra.mxu0 0
      %470 = vmatprep.subr.bf16.mxu0 0
      %471 = vmatpush1.bf16.msra.mxu0 0
      %472 = vmatprep.subr.bf16.mxu0 0
      %473 = vmatpush1.bf16.msra.mxu0 0
      %474 = vmatprep.subr.bf16.mxu0 0
      %475 = vmatpush1.bf16.msra.mxu0 0
      %476 = vmatprep.subr.bf16.mxu0 0
      %477 = vmatpush1.bf16.msra.mxu0 0
      %478 = vmatprep.subr.bf16.mxu0 0
      %479 = vmatpush1.bf16.msra.mxu0 0
      %480 = vmatprep.subr.bf16.mxu0 0
      %481 = vmatpush1.bf16.msra.mxu0 0
      %482 = vmatprep.mubr.bf16.mxu0 0
      %483 = vmatmul.mubr.bf16.gmra.mrb[0].mxu0 %v445
      %v484 = vpop.f32.mrb[0].mxu0
      %v485 = vadd.f32 0.0, %v484
      %v486 = vpop.f32.mrb[0].mxu0
      %v487 = vpop.f32.mrb[0].mxu0
      %v488 = vpop.f32.mrb[0].mxu0
      %489 = vdwg.mxu0
      %v490 = vrcp.pop %v440
      %v491 = vmul.f32 %v485, %v490
      %v492 = vpack.c.bf16 %v491, %v491
      %v495 = vunpack.c.l.s4 1983009808
      %v496 = vunpack.c.0.s8 %v495
      %v497 = vlaneseq
      %v498 = vshrl.u32 %v497, 7
      %v499 = vsub.s32 %v496, %v498
      %v500 = vrot.slane %v492, %v499
      %501 = vrot.lane.b32.xlu0 %v500, 16
      %v502 = vpop.permute.xlu0 %501
      %vm504 = vcmask 189568
      %505 = vst.msk [vmem:[%s111] sm:$0x3] %vm504, %v502
      %v506 = vld [vmem:[%s107] sm:$0x3]
      %v509 = vunpack.c.l.s4 1983009808
      %v510 = vunpack.c.0.s8 %v509
      %v511 = vlaneseq
      %v512 = vshrl.u32 %v511, 7
      %v513 = vsub.s32 %v510, %v512
      %v514 = vrot.slane %v506, %v513
      %515 = vrot.lane.b32.xlu0 %v514, 104
      %v516 = vpop.permute.xlu0 %515
      %517 = vrot.lane.b32.xlu0 %v514, 72
      %v518 = vpop.permute.xlu0 %517
      %v520 = vsel %vm124, %v516, 0
      %v523 = vsel %vm124, %v518, 0
      %525 = vmatprep.subr.bf16.mxu0 0
      %526 = vmatpush1.bf16.xpose.msra.mxu0 %v523
      %527 = vmatprep.subr.bf16.mxu0 0
      %528 = vmatpush1.bf16.xpose.msra.mxu0 0
      %529 = vmatprep.subr.bf16.mxu0 0
      %530 = vmatpush1.bf16.xpose.msra.mxu0 0
      %531 = vmatprep.subr.bf16.mxu0 0
      %532 = vmatpush1.bf16.xpose.msra.mxu0 0
      %533 = vmatprep.subr.bf16.mxu0 0
      %534 = vmatpush1.bf16.xpose.msra.mxu0 0
      %535 = vmatprep.subr.bf16.mxu0 0
      %536 = vmatpush1.bf16.xpose.msra.mxu0 0
      %537 = vmatprep.subr.bf16.mxu0 0
      %538 = vmatpush1.bf16.xpose.msra.mxu0 0
      %539 = vmatprep.subr.bf16.mxu0 0
      %540 = vmatpush1.bf16.xpose.msra.mxu0 0
      %541 = vmatprep.subr.bf16.mxu0 0
      %542 = vmatpush1.bf16.xpose.msra.mxu0 0
      %543 = vmatprep.subr.bf16.mxu0 0
      %544 = vmatpush1.bf16.xpose.msra.mxu0 0
      %545 = vmatprep.subr.bf16.mxu0 0
      %546 = vmatpush1.bf16.xpose.msra.mxu0 0
      %547 = vmatprep.subr.bf16.mxu0 0
      %548 = vmatpush1.bf16.xpose.msra.mxu0 0
      %549 = vmatprep.subr.bf16.mxu0 0
      %550 = vmatpush1.bf16.xpose.msra.mxu0 0
      %551 = vmatprep.subr.bf16.mxu0 0
      %552 = vmatpush1.bf16.xpose.msra.mxu0 0
      %553 = vmatprep.subr.bf16.mxu0 0
      %554 = vmatpush1.bf16.xpose.msra.mxu0 0
      %555 = vmatprep.subr.bf16.mxu0 0
      %556 = vmatpush1.bf16.xpose.msra.mxu0 0
      %557 = vmatprep.mubr.bf16.mxu0 0
      %558 = vmatmul.mubr.bf16.gmra.mrb[0].mxu0 %v520
      %v559 = vpop.f32.mrb[0].mxu0
      %v560 = vadd.f32 0.0, %v559
      %v561 = vpop.f32.mrb[0].mxu0
      %v562 = vpop.f32.mrb[0].mxu0
      %v563 = vpop.f32.mrb[0].mxu0
      %564 = vdwg.mxu0
      %v565 = vmul.f32 %v560, 0.35355338
      %v566 = vsel %vm172, %v565, -inf
      %567 = vmax.xlane.f32.xlu0 %v566
      %v568 = vpop.xlane.xlu0 %567
      %v569 = vsub.f32 %v565, %v568
      %v570 = vmul.f32 %v569, 1.442695
      %v571 = vpow.pop %v570
      %v572 = vsel %vm172, %v571, 0.0
      %573 = vadd.xlane.f32.xlu0 %v572
      %v574 = vpop.xlane.xlu0 %573
      %v575 = vpack.c.bf16 %v571, %v571
      %576 = vrot.lane.b32.xlu0 %v514, 40
      %v577 = vpop.permute.xlu0 %576
      %v579 = vsel %vm185, %v575, 0
      %v582 = vsel %vm189, %v577, 0
      %584 = vmatprep.subr.bf16.mxu0 0
      %585 = vmatpush1.bf16.msra.mxu0 %v582
      %586 = vmatprep.subr.bf16.mxu0 0
      %587 = vmatpush1.bf16.msra.mxu0 0
      %588 = vmatprep.subr.bf16.mxu0 0
      %589 = vmatpush1.bf16.msra.mxu0 0
      %590 = vmatprep.subr.bf16.mxu0 0
      %591 = vmatpush1.bf16.msra.mxu0 0
      %592 = vmatprep.subr.bf16.mxu0 0
      %593 = vmatpush1.bf16.msra.mxu0 0
      %594 = vmatprep.subr.bf16.mxu0 0
      %595 = vmatpush1.bf16.msra.mxu0 0
      %596 = vmatprep.subr.bf16.mxu0 0
      %597 = vmatpush1.bf16.msra.mxu0 0
      %598 = vmatprep.subr.bf16.mxu0 0
      %599 = vmatpush1.bf16.msra.mxu0 0
      %600 = vmatprep.subr.bf16.mxu0 0
      %601 = vmatpush1.bf16.msra.mxu0 0
      %602 = vmatprep.subr.bf16.mxu0 0
      %603 = vmatpush1.bf16.msra.mxu0 0
      %604 = vmatprep.subr.bf16.mxu0 0
      %605 = vmatpush1.bf16.msra.mxu0 0
      %606 = vmatprep.subr.bf16.mxu0 0
      %607 = vmatpush1.bf16.msra.mxu0 0
      %608 = vmatprep.subr.bf16.mxu0 0
      %609 = vmatpush1.bf16.msra.mxu0 0
      %610 = vmatprep.subr.bf16.mxu0 0
      %611 = vmatpush1.bf16.msra.mxu0 0
      %612 = vmatprep.subr.bf16.mxu0 0
      %613 = vmatpush1.bf16.msra.mxu0 0
      %614 = vmatprep.subr.bf16.mxu0 0
      %615 = vmatpush1.bf16.msra.mxu0 0
      %616 = vmatprep.mubr.bf16.mxu0 0
      %617 = vmatmul.mubr.bf16.gmra.mrb[0].mxu0 %v579
      %v618 = vpop.f32.mrb[0].mxu0
      %v619 = vadd.f32 0.0, %v618
      %v620 = vpop.f32.mrb[0].mxu0
      %v621 = vpop.f32.mrb[0].mxu0
      %v622 = vpop.f32.mrb[0].mxu0
      %623 = vdwg.mxu0
      %v624 = vrcp.pop %v574
      %v625 = vmul.f32 %v619, %v624
      %v626 = vpack.c.bf16 %v625, %v625
      %v629 = vunpack.c.l.s4 1983009808
      %v630 = vunpack.c.0.s8 %v629
      %v631 = vlaneseq
      %v632 = vshrl.u32 %v631, 7
      %v633 = vsub.s32 %v630, %v632
      %v634 = vrot.slane %v626, %v633
      %635 = vrot.lane.b32.xlu0 %v634, 24
      %v636 = vpop.permute.xlu0 %635
      %vm638 = vcmask 255168
      %639 = vst.msk [vmem:[%s111] sm:$0x3] %vm638, %v636
      %p640 = scmp.lt.s32.totalorder %s12, 1
      %s641 = scalar_select %p640, %s12, 1
      %s642 = smul.addr %s641, 2
      %s643 = scalar_lea.vmem %s1, %s642
      // Predicated region
      $region25: #{siglip_vision_tower_forward.14} parent=23 // pred_check
        %p644 = pneg %p56
      $region26: #{siglip_vision_tower_forward.14} parent=23 // pred_check_branch
        %646 = sbr.rel (%p644) target = $region28
      $region27: #{siglip_vision_tower_forward.14} parent=23 // pred_region
        _
      $region28: #{siglip_vision_tower_forward.14} parent=23 // pred_fallthru
        _
    $region24: #{siglip_vision_tower_forward.14} parent=5 // pred_fallthru
      _
    %p647 = scmp.le.s32.totalorder 2, %s7
    // Predicated region
    $region29: #{siglip_vision_tower_forward.14} parent=5 // pred_check
      %p648 = pneg %p647
    $region30: #{siglip_vision_tower_forward.14} parent=5 // pred_check_branch
      %650 = sbr.rel (%p648) target = $region32
    $region31: #{siglip_vision_tower_forward.14} parent=5 // pred_region
      %s651 = ssub.s32 %s7, 2
      // Predicated region
      $region33: #{siglip_vision_tower_forward.14} parent=31 // pred_check
        %p652 = pneg %p62
      $region34: #{siglip_vision_tower_forward.14} parent=31 // pred_check_branch
        %654 = sbr.rel (%p652) target = $region36
      $region35: #{siglip_vision_tower_forward.14} parent=31 // pred_region
        %p655 = scmp.lt.s32.totalorder %s13, 1
        %s656 = scalar_select %p655, %s13, 1
        %s657 = smul.addr %s656, 2
        %s658 = scalar_lea.vmem %s1, %s657
      $region36: #{siglip_vision_tower_forward.14} parent=31 // pred_fallthru
        _
    $region32: #{siglip_vision_tower_forward.14} parent=5 // pred_fallthru
      _
  $region6: #{siglip_vision_tower_forward.14} parent=0 // loop_footer
    %s11 = sadd.s32 1, %s7
  $region7: #{siglip_vision_tower_forward.14} parent=0 // loop_footer_branch
    %6 = sbr.rel target = $region3
  $region8: #{siglip_vision_tower_forward.14} parent=0 // loop_exit
    _

// kernel: siglip_vision_tower_forward.16
$region0: #{siglip_vision_tower_forward.16}
  #allocation0 [shape = 'u32[]', space=smem, size = 0x4, offset = 0x4, fixed_abs, tag = 'smem constant byte address 0x4 - core index']
  #allocation1 [shape = 'u32[144,128]{1,0:T(1,128)}', space=vmem, size = 0x12000, scoped, tag = 'internal scratch']
  %s0 = inlined_call_operand.vmem [shape: bf16[8,32], index: 0, kind: input, shape index: {}]
  %s1 = inlined_call_operand.vmem [shape: bf16[32,64], index: 1, kind: input, shape index: {}]
  %s2 = inlined_call_operand.vmem [shape: bf16[1,64], index: 2, kind: input, shape index: {}]
  %s3 = inlined_call_operand.vmem [shape: bf16[1,32], index: 3, kind: input, shape index: {}]
  %s4 = inlined_call_operand.vmem [shape: bf16[1,32], index: 4, kind: input, shape index: {}]
  %s5 = inlined_call_operand.vmem [shape: bf16[8,64], index: 5, kind: output, shape index: {}]
  %s6 = sld [smem:[#allocation0]]
  $region30: #{siglip_vision_tower_forward.16} parent=0
    _
  %s8 = ssub.s32 1, %s6
  %s9 = scalar_select 0, %s8, %s6
  // Predicated region
  $region2: #{siglip_vision_tower_forward.16} parent=0 // pred_check
    _
  $region3: #{siglip_vision_tower_forward.16} parent=0 // pred_check_branch
    %11 = sbr.rel (0) target = $region5
  $region4: #{siglip_vision_tower_forward.16} parent=0 // pred_region
    _
  $region5: #{siglip_vision_tower_forward.16} parent=0 // pred_fallthru
    _
  // Predicated region
  $region6: #{siglip_vision_tower_forward.16} parent=0 // pred_check
    _
  $region7: #{siglip_vision_tower_forward.16} parent=0 // pred_check_branch
    %13 = sbr.rel (0) target = $region9
  $region8: #{siglip_vision_tower_forward.16} parent=0 // pred_region
    _
  $region9: #{siglip_vision_tower_forward.16} parent=0 // pred_fallthru
    _
  // Predicated region
  $region10: #{siglip_vision_tower_forward.16} parent=0 // pred_check
    _
  $region11: #{siglip_vision_tower_forward.16} parent=0 // pred_check_branch
    %15 = sbr.rel (0) target = $region13
  $region12: #{siglip_vision_tower_forward.16} parent=0 // pred_region
    _
  $region13: #{siglip_vision_tower_forward.16} parent=0 // pred_fallthru
    _
  // Predicated region
  $region14: #{siglip_vision_tower_forward.16} parent=0 // pred_check
    _
  $region15: #{siglip_vision_tower_forward.16} parent=0 // pred_check_branch
    %17 = sbr.rel (0) target = $region17
  $region16: #{siglip_vision_tower_forward.16} parent=0 // pred_region
    _
  $region17: #{siglip_vision_tower_forward.16} parent=0 // pred_fallthru
    _
  // Predicated region
  $region18: #{siglip_vision_tower_forward.16} parent=0 // pred_check
    _
  $region19: #{siglip_vision_tower_forward.16} parent=0 // pred_check_branch
    %19 = sbr.rel (0) target = $region21
  $region20: #{siglip_vision_tower_forward.16} parent=0 // pred_region
    _
  $region21: #{siglip_vision_tower_forward.16} parent=0 // pred_fallthru
    _
  %v21 = vld [vmem:[%s0] sm:$0xf]
  %v22 = vunpack.c.l.bf16 %v21
  %vm23 = vcmask 261120
  %v24 = vsel %vm23, %v22, 0.0
  %25 = vadd.xlane.f32.xlu0 %v24
  %v26 = vpop.xlane.xlu0 %25
  %v27 = vrcp.pop 32.0
  %v28 = vmul.f32 %v26, %v27
  %v29 = vsub.f32 %v22, %v28
  %v30 = vmul.f32 %v29, %v29
  %v31 = vsel %vm23, %v30, 0.0
  %32 = vadd.xlane.f32.xlu0 %v31
  %v33 = vpop.xlane.xlu0 %32
  %v34 = vmul.f32 %v33, %v27
  %v35 = vadd.f32 %v34, 1e-06
  %v36 = vrsqrt.pop %v35
  %v37 = vmul.f32 %v29, %v36
  %v38 = vld [vmem:[%s3] sm:$0x1]
  %v39 = vunpack.c.l.bf16 %v38
  %v40 = vlaneseq
  %v41 = vshrl.u32 %v40, 7
  %v42 = vsub.s32 0, %v41
  %v43 = vrot.slane %v39, %v42
  %v44 = vmul.f32 %v37, %v43
  %v45 = vld [vmem:[%s4] sm:$0x1]
  %v46 = vunpack.c.l.bf16 %v45
  %v47 = vlaneseq
  %v48 = vshrl.u32 %v47, 7
  %v49 = vsub.s32 0, %v48
  %v50 = vrot.slane %v46, %v49
  %v51 = vadd.f32 %v44, %v50
  %v52 = vpack.c.bf16 %v51, %v51
  %v53 = vld [vmem:[%s1] sm:$0xf]
  %v54 = vld [vmem:[%s1 + $0x4] sm:$0xf]
  %v55 = vld [vmem:[%s1 + $0x8] sm:$0xf]
  %v56 = vld [vmem:[%s1 + $0xc] sm:$0xf]
  %v57 = vld [vmem:[%s2] sm:$0x1]
  %v58 = vunpack.c.l.bf16 %v57
  %v59 = vlaneseq
  %v60 = vshrl.u32 %v59, 7
  %v61 = vsub.s32 0, %v60
  %v62 = vrot.slane %v58, %v61
  %v67 = vunpack.c.l.b16 %v53
  %v68 = vunpack.c.l.b16 %v54
  %v69 = vunpack.c.l.b16 %v55
  %v70 = vunpack.c.l.b16 %v56
  %v71 = vpack.c.b16 %v68, %v67
  %v72 = vpack.c.b16 %v70, %v69
  %v76 = vsel %vm23, %v52, 0
  %78 = vmatprep.subr.bf16.mxu0 0
  %79 = vmatpush1.bf16.msra.mxu0 %v71
  %80 = vmatprep.subr.bf16.mxu0 0
  %81 = vmatpush1.bf16.msra.mxu0 %v72
  %82 = vmatprep.subr.bf16.mxu0 0
  %83 = vmatpush1.bf16.msra.mxu0 0
  %84 = vmatprep.subr.bf16.mxu0 0
  %85 = vmatpush1.bf16.msra.mxu0 0
  %86 = vmatprep.subr.bf16.mxu0 0
  %87 = vmatpush1.bf16.msra.mxu0 0
  %88 = vmatprep.subr.bf16.mxu0 0
  %89 = vmatpush1.bf16.msra.mxu0 0
  %90 = vmatprep.subr.bf16.mxu0 0
  %91 = vmatpush1.bf16.msra.mxu0 0
  %92 = vmatprep.subr.bf16.mxu0 0
  %93 = vmatpush1.bf16.msra.mxu0 0
  %94 = vmatprep.subr.bf16.mxu0 0
  %95 = vmatpush1.bf16.msra.mxu0 0
  %96 = vmatprep.subr.bf16.mxu0 0
  %97 = vmatpush1.bf16.msra.mxu0 0
  %98 = vmatprep.subr.bf16.mxu0 0
  %99 = vmatpush1.bf16.msra.mxu0 0
  %100 = vmatprep.subr.bf16.mxu0 0
  %101 = vmatpush1.bf16.msra.mxu0 0
  %102 = vmatprep.subr.bf16.mxu0 0
  %103 = vmatpush1.bf16.msra.mxu0 0
  %104 = vmatprep.subr.bf16.mxu0 0
  %105 = vmatpush1.bf16.msra.mxu0 0
  %106 = vmatprep.subr.bf16.mxu0 0
  %107 = vmatpush1.bf16.msra.mxu0 0
  %108 = vmatprep.subr.bf16.mxu0 0
  %109 = vmatpush1.bf16.msra.mxu0 0
  %110 = vmatprep.mubr.bf16.mxu0 0
  %111 = vmatmul.mubr.bf16.gmra.mrb[0].mxu0 %v76
  %v112 = vpop.f32.mrb[0].mxu0
  %v113 = vadd.f32 %v62, %v112
  %v114 = vpop.f32.mrb[0].mxu0
  %v115 = vpop.f32.mrb[0].mxu0
  %v116 = vpop.f32.mrb[0].mxu0
  %117 = vdwg.mxu0
  %v118 = vmul.f32 %v113, 0.5
  %v119 = vmul.f32 %v113, 0.044715
  %v120 = vmul.f32 %v119, %v113
  %v121 = vmul.f32 %v120, %v113
  %v122 = vadd.f32 %v113, %v121
  %v123 = vmul.f32 %v122, 0.7978846
  %v124 = vtanh.pop %v123
  %v125 = vadd.f32 %v124, 1.0
  %v126 = vmul.f32 %v118, %v125
  %v127 = vpack.c.bf16 %v126, %v126
  %vm128 = vcmask 519168
  %129 = vst.msk [vmem:[%s5] sm:$0xf] %vm128, %v127
  // Predicated region
  $region22: #{siglip_vision_tower_forward.16} parent=0 // pred_check
    _
  $region23: #{siglip_vision_tower_forward.16} parent=0 // pred_check_branch
    %131 = sbr.rel (0) target = $region25
  $region24: #{siglip_vision_tower_forward.16} parent=0 // pred_region
    _
  $region25: #{siglip_vision_tower_forward.16} parent=0 // pred_fallthru
    _
  // Predicated region
  $region26: #{siglip_vision_tower_forward.16} parent=0 // pred_check
    _
  $region27: #{siglip_vision_tower_forward.16} parent=0 // pred_check_branch
    %133 = sbr.rel (0) target = $region29
  $region28: #{siglip_vision_tower_forward.16} parent=0 // pred_region
    _
  $region29: #{siglip_vision_tower_forward.16} parent=0 // pred_fallthru
    _

// kernel: siglip_vision_tower_forward.17
$region0: #{siglip_vision_tower_forward.17}
  #allocation0 [shape = 'u32[]', space=smem, size = 0x4, offset = 0x4, fixed_abs, tag = 'smem constant byte address 0x4 - core index']
  #allocation1 [shape = 'u32[144,128]{1,0:T(1,128)}', space=vmem, size = 0x12000, scoped, tag = 'internal scratch']
  %s0 = inlined_call_operand.vmem [shape: bf16[8,64], index: 0, kind: input, shape index: {}]
  %s1 = inlined_call_operand.vmem [shape: bf16[64,32], index: 1, kind: input, shape index: {}]
  %s2 = inlined_call_operand.vmem [shape: bf16[1,32], index: 2, kind: input, shape index: {}]
  %s3 = inlined_call_operand.vmem [shape: bf16[8,32], index: 3, kind: input, shape index: {}]
  %s4 = inlined_call_operand.vmem [shape: bf16[8,32], index: 4, kind: output, shape index: {}]
  %s5 = sld [smem:[#allocation0]]
  $region26: #{siglip_vision_tower_forward.17} parent=0
    _
  %s7 = ssub.s32 1, %s5
  %s8 = scalar_select 0, %s7, %s5
  // Predicated region
  $region2: #{siglip_vision_tower_forward.17} parent=0 // pred_check
    _
  $region3: #{siglip_vision_tower_forward.17} parent=0 // pred_check_branch
    %10 = sbr.rel (0) target = $region5
  $region4: #{siglip_vision_tower_forward.17} parent=0 // pred_region
    _
  $region5: #{siglip_vision_tower_forward.17} parent=0 // pred_fallthru
    _
  // Predicated region
  $region6: #{siglip_vision_tower_forward.17} parent=0 // pred_check
    _
  $region7: #{siglip_vision_tower_forward.17} parent=0 // pred_check_branch
    %12 = sbr.rel (0) target = $region9
  $region8: #{siglip_vision_tower_forward.17} parent=0 // pred_region
    _
  $region9: #{siglip_vision_tower_forward.17} parent=0 // pred_fallthru
    _
  // Predicated region
  $region10: #{siglip_vision_tower_forward.17} parent=0 // pred_check
    _
  $region11: #{siglip_vision_tower_forward.17} parent=0 // pred_check_branch
    %14 = sbr.rel (0) target = $region13
  $region12: #{siglip_vision_tower_forward.17} parent=0 // pred_region
    _
  $region13: #{siglip_vision_tower_forward.17} parent=0 // pred_fallthru
    _
  // Predicated region
  $region14: #{siglip_vision_tower_forward.17} parent=0 // pred_check
    _
  $region15: #{siglip_vision_tower_forward.17} parent=0 // pred_check_branch
    %16 = sbr.rel (0) target = $region17
  $region16: #{siglip_vision_tower_forward.17} parent=0 // pred_region
    _
  $region17: #{siglip_vision_tower_forward.17} parent=0 // pred_fallthru
    _
  %v18 = vld [vmem:[%s0] sm:$0xf]
  %v19 = vld [vmem:[%s1] sm:$0xf]
  %v20 = vld [vmem:[%s1 + $0x4] sm:$0xf]
  %v21 = vld [vmem:[%s1 + $0x8] sm:$0xf]
  %v22 = vld [vmem:[%s1 + $0xc] sm:$0xf]
  %v23 = vld [vmem:[%s1 + $0x10] sm:$0xf]
  %v24 = vld [vmem:[%s1 + $0x14] sm:$0xf]
  %v25 = vld [vmem:[%s1 + $0x18] sm:$0xf]
  %v26 = vld [vmem:[%s1 + $0x1c] sm:$0xf]
  %v27 = vld [vmem:[%s2] sm:$0x1]
  %v28 = vunpack.c.l.bf16 %v27
  %v29 = vlaneseq
  %v30 = vshrl.u32 %v29, 7
  %v31 = vsub.s32 0, %v30
  %v32 = vrot.slane %v28, %v31
  %v41 = vunpack.c.l.b16 %v19
  %v42 = vunpack.c.l.b16 %v20
  %v43 = vunpack.c.l.b16 %v21
  %v44 = vunpack.c.l.b16 %v22
  %v45 = vunpack.c.l.b16 %v23
  %v46 = vunpack.c.l.b16 %v24
  %v47 = vunpack.c.l.b16 %v25
  %v48 = vunpack.c.l.b16 %v26
  %v49 = vpack.c.b16 %v42, %v41
  %v50 = vpack.c.b16 %v44, %v43
  %v51 = vpack.c.b16 %v46, %v45
  %v52 = vpack.c.b16 %v48, %v47
  %vm57 = vcmask 523264
  %v59 = vsel %vm57, %v18, 0
  %61 = vmatprep.subr.bf16.mxu0 0
  %62 = vmatpush1.bf16.msra.mxu0 %v49
  %63 = vmatprep.subr.bf16.mxu0 0
  %64 = vmatpush1.bf16.msra.mxu0 %v50
  %65 = vmatprep.subr.bf16.mxu0 0
  %66 = vmatpush1.bf16.msra.mxu0 %v51
  %67 = vmatprep.subr.bf16.mxu0 0
  %68 = vmatpush1.bf16.msra.mxu0 %v52
  %69 = vmatprep.subr.bf16.mxu0 0
  %70 = vmatpush1.bf16.msra.mxu0 0
  %71 = vmatprep.subr.bf16.mxu0 0
  %72 = vmatpush1.bf16.msra.mxu0 0
  %73 = vmatprep.subr.bf16.mxu0 0
  %74 = vmatpush1.bf16.msra.mxu0 0
  %75 = vmatprep.subr.bf16.mxu0 0
  %76 = vmatpush1.bf16.msra.mxu0 0
  %77 = vmatprep.subr.bf16.mxu0 0
  %78 = vmatpush1.bf16.msra.mxu0 0
  %79 = vmatprep.subr.bf16.mxu0 0
  %80 = vmatpush1.bf16.msra.mxu0 0
  %81 = vmatprep.subr.bf16.mxu0 0
  %82 = vmatpush1.bf16.msra.mxu0 0
  %83 = vmatprep.subr.bf16.mxu0 0
  %84 = vmatpush1.bf16.msra.mxu0 0
  %85 = vmatprep.subr.bf16.mxu0 0
  %86 = vmatpush1.bf16.msra.mxu0 0
  %87 = vmatprep.subr.bf16.mxu0 0
  %88 = vmatpush1.bf16.msra.mxu0 0
  %89 = vmatprep.subr.bf16.mxu0 0
  %90 = vmatpush1.bf16.msra.mxu0 0
  %91 = vmatprep.subr.bf16.mxu0 0
  %92 = vmatpush1.bf16.msra.mxu0 0
  %93 = vmatprep.mubr.bf16.mxu0 0
  %94 = vmatmul.mubr.bf16.gmra.mrb[0].mxu0 %v59
  %v95 = vpop.f32.mrb[0].mxu0
  %v96 = vadd.f32 %v32, %v95
  %v97 = vpop.f32.mrb[0].mxu0
  %v98 = vpop.f32.mrb[0].mxu0
  %v99 = vpop.f32.mrb[0].mxu0
  %100 = vdwg.mxu0
  %v101 = vld [vmem:[%s3] sm:$0xf]
  %v102 = vunpack.c.l.bf16 %v101
  %v103 = vadd.f32 %v96, %v102
  %v104 = vpack.c.bf16 %v103, %v103
  %vm105 = vcmask 257024
  %106 = vst.msk [vmem:[%s4] sm:$0xf] %vm105, %v104
  // Predicated region
  $region18: #{siglip_vision_tower_forward.17} parent=0 // pred_check
    _
  $region19: #{siglip_vision_tower_forward.17} parent=0 // pred_check_branch
    %108 = sbr.rel (0) target = $region21
  $region20: #{siglip_vision_tower_forward.17} parent=0 // pred_region
    _
  $region21: #{siglip_vision_tower_forward.17} parent=0 // pred_fallthru
    _
  // Predicated region
  $region22: #{siglip_vision_tower_forward.17} parent=0 // pred_check
    _
  $region23: #{siglip_vision_tower_forward.17} parent=0 // pred_check_branch
    %110 = sbr.rel (0) target = $region25
  $region24: #{siglip_vision_tower_forward.17} parent=0 // pred_region
    _
  $region25: #{siglip_vision_tower_forward.17} parent=0 // pred_fallthru
    _

// kernel: siglip_vision_tower_forward.23
$region0: #{siglip_vision_tower_forward.23}
  #allocation0 [shape = 'u32[]', space=smem, size = 0x4, offset = 0x4, fixed_abs, tag = 'smem constant byte address 0x4 - core index']
  #allocation1 [shape = 'u32[144,128]{1,0:T(1,128)}', space=vmem, size = 0x12000, scoped, tag = 'internal scratch']
  %s0 = inlined_call_operand.vmem [shape: bf16[6,32], index: 0, kind: input, shape index: {}]
  %s1 = inlined_call_operand.vmem [shape: bf16[32,32], index: 1, kind: input, shape index: {}]
  %s2 = inlined_call_operand.vmem [shape: bf16[1,32], index: 2, kind: input, shape index: {}]
  %s3 = inlined_call_operand.vmem [shape: f32[6,32], index: 3, kind: output, shape index: {}]
  %s4 = sld [smem:[#allocation0]]
  $region22: #{siglip_vision_tower_forward.23} parent=0
    _
  %s6 = ssub.s32 1, %s4
  %s7 = scalar_select 0, %s6, %s4
  // Predicated region
  $region2: #{siglip_vision_tower_forward.23} parent=0 // pred_check
    _
  $region3: #{siglip_vision_tower_forward.23} parent=0 // pred_check_branch
    %9 = sbr.rel (0) target = $region5
  $region4: #{siglip_vision_tower_forward.23} parent=0 // pred_region
    _
  $region5: #{siglip_vision_tower_forward.23} parent=0 // pred_fallthru
    _
  // Predicated region
  $region6: #{siglip_vision_tower_forward.23} parent=0 // pred_check
    _
  $region7: #{siglip_vision_tower_forward.23} parent=0 // pred_check_branch
    %11 = sbr.rel (0) target = $region9
  $region8: #{siglip_vision_tower_forward.23} parent=0 // pred_region
    _
  $region9: #{siglip_vision_tower_forward.23} parent=0 // pred_fallthru
    _
  // Predicated region
  $region10: #{siglip_vision_tower_forward.23} parent=0 // pred_check
    _
  $region11: #{siglip_vision_tower_forward.23} parent=0 // pred_check_branch
    %13 = sbr.rel (0) target = $region13
  $region12: #{siglip_vision_tower_forward.23} parent=0 // pred_region
    _
  $region13: #{siglip_vision_tower_forward.23} parent=0 // pred_fallthru
    _
  %v15 = vld [vmem:[%s0] sm:$0x7]
  %v16 = vld [vmem:[%s1] sm:$0xf]
  %v17 = vld [vmem:[%s1 + $0x4] sm:$0xf]
  %v18 = vld [vmem:[%s1 + $0x8] sm:$0xf]
  %v19 = vld [vmem:[%s1 + $0xc] sm:$0xf]
  %v20 = vld [vmem:[%s2] sm:$0x1]
  %v21 = vunpack.c.l.bf16 %v20
  %v22 = vlaneseq
  %v23 = vshrl.u32 %v22, 7
  %v24 = vsub.s32 0, %v23
  %v25 = vrot.slane %v21, %v24
  %v30 = vunpack.c.l.b16 %v16
  %v31 = vunpack.c.l.b16 %v17
  %v32 = vunpack.c.l.b16 %v18
  %v33 = vunpack.c.l.b16 %v19
  %v34 = vpack.c.b16 %v31, %v30
  %v35 = vpack.c.b16 %v33, %v32
  %vm38 = vcmask 261120
  %v40 = vsel %vm38, %v15, 0
  %42 = vmatprep.subr.bf16.mxu0 0
  %43 = vmatpush1.bf16.msra.mxu0 %v34
  %44 = vmatprep.subr.bf16.mxu0 0
  %45 = vmatpush1.bf16.msra.mxu0 %v35
  %46 = vmatprep.subr.bf16.mxu0 0
  %47 = vmatpush1.bf16.msra.mxu0 0
  %48 = vmatprep.subr.bf16.mxu0 0
  %49 = vmatpush1.bf16.msra.mxu0 0
  %50 = vmatprep.subr.bf16.mxu0 0
  %51 = vmatpush1.bf16.msra.mxu0 0
  %52 = vmatprep.subr.bf16.mxu0 0
  %53 = vmatpush1.bf16.msra.mxu0 0
  %54 = vmatprep.subr.bf16.mxu0 0
  %55 = vmatpush1.bf16.msra.mxu0 0
  %56 = vmatprep.subr.bf16.mxu0 0
  %57 = vmatpush1.bf16.msra.mxu0 0
  %58 = vmatprep.subr.bf16.mxu0 0
  %59 = vmatpush1.bf16.msra.mxu0 0
  %60 = vmatprep.subr.bf16.mxu0 0
  %61 = vmatpush1.bf16.msra.mxu0 0
  %62 = vmatprep.subr.bf16.mxu0 0
  %63 = vmatpush1.bf16.msra.mxu0 0
  %64 = vmatprep.subr.bf16.mxu0 0
  %65 = vmatpush1.bf16.msra.mxu0 0
  %66 = vmatprep.subr.bf16.mxu0 0
  %67 = vmatpush1.bf16.msra.mxu0 0
  %68 = vmatprep.subr.bf16.mxu0 0
  %69 = vmatpush1.bf16.msra.mxu0 0
  %70 = vmatprep.subr.bf16.mxu0 0
  %71 = vmatpush1.bf16.msra.mxu0 0
  %72 = vmatprep.subr.bf16.mxu0 0
  %73 = vmatpush1.bf16.msra.mxu0 0
  %74 = vmatprep.mubr.bf16.mxu0 0
  %75 = vmatmul.mubr.bf16.gmra.mrb[0].mxu0 %v40
  %v76 = vpop.f32.mrb[0].mxu0
  %v77 = vadd.f32 %v25, %v76
  %v78 = vpop.f32.mrb[0].mxu0
  %v79 = vpop.f32.mrb[0].mxu0
  %v80 = vpop.f32.mrb[0].mxu0
  %81 = vdwg.mxu0
  %vm82 = vcmask 259072
  %83 = vst.msk [vmem:[%s3] sm:$0x3f] %vm82, %v77
  // Predicated region
  $region14: #{siglip_vision_tower_forward.23} parent=0 // pred_check
    _
  $region15: #{siglip_vision_tower_forward.23} parent=0 // pred_check_branch
    %85 = sbr.rel (0) target = $region17
  $region16: #{siglip_vision_tower_forward.23} parent=0 // pred_region
    _
  $region17: #{siglip_vision_tower_forward.23} parent=0 // pred_fallthru
    _
  // Predicated region
  $region18: #{siglip_vision_tower_forward.23} parent=0 // pred_check
    _
  $region19: #{siglip_vision_tower_forward.23} parent=0 // pred_check_branch
    %87 = sbr.rel (0) target = $region21
  $region20: #{siglip_vision_tower_forward.23} parent=0 // pred_region
    _
  $region21: #{siglip_vision_tower_forward.23} parent=0 // pred_fallthru
    _

</llo_original>
